<compile_context>
chip_gen: v7x
topology: tpu7x:2x2x1
jax: 0.10.0
libtpu: 0.0.40
codegen_flags: <defaults>
</compile_context>

<pallas_src>
import jax
import jax.numpy as jnp
from jax.experimental import pallas as pl
from jax.experimental.pallas import tpu as pltpu

HIDDEN = 128  # fixed by the module (nn.Linear(3*h*w, 128))


def _round_up(x, m):
    return ((x + m - 1) // m) * m


def _mlp_kernel(x_ref, w1_ref, b1_ref, w2_ref, b2_ref, o_ref):
    # x_ref : (tm, D)      f32  flattened image tile (bf16 cast happens in-register)
    # w1_ref: (D, 128)     bf16 fc1 weight (in, out)           -- VMEM-resident
    # b1_ref: (1, 128)     f32  fc1 bias
    # w2_ref: (128, Np)    bf16 fc2 weight, zero-padded to Np lanes
    # b2_ref: (1, Np)      f32  fc2 bias, zero-padded
    # o_ref : (tm, Np)     f32  padded logits (lane-dense, unmasked stores)
    x_bf = x_ref[...].astype(jnp.bfloat16)  # cast in-register; x read from HBM once as f32
    h = jnp.dot(x_bf, w1_ref[...], preferred_element_type=jnp.float32)
    h = jnp.maximum(h + b1_ref[...], 0.0)                      # fc1 + bias + ReLU (f32)
    y = jnp.dot(h.astype(jnp.bfloat16), w2_ref[...],
                preferred_element_type=jnp.float32)            # fc2 on MXU
    o_ref[...] = (y + b2_ref[...]).astype(o_ref.dtype)


def _pick_tm(b, d, n_pad, *, tm_max=512, vmem_budget=32 << 20):
    """Largest 128-aligned batch tile that (a) keeps double-buffered x/out tiles
    plus resident weights inside a conservative VMEM budget (safe on v7x's
    64 MiB physical VMEM) and (b) leaves >= 2 grid steps for megacore sharding
    whenever there is enough work for two TensorCores."""
    tm = max(128, min(tm_max, _round_up(b, 128)))
    while tm > 128:
        need = (2 * tm * d * 4            # f32 x tile, double-buffered
                + 2 * tm * n_pad * 4      # f32 out tile, double-buffered
                + 2 * d * HIDDEN * 2      # bf16 w1 (resident, default 2 bufs)
                + 2 * HIDDEN * n_pad * 2)  # bf16 w2
        if need <= vmem_budget:
            break
        tm //= 2
    # v7x megacore: a single grid step serializes on one TensorCore
    if b > 128 and pl.cdiv(b, tm) < 2:
        tm = max(128, _round_up(pl.cdiv(b, 2), 128))
    return tm


def mlp_classifier_forward(x_nchw, w1, b1, w2, b2, *, tm_max=512):
    """x_nchw: (b, 3, H, W) f32. w1: (D,128), b1: (128,), w2: (128,C), b2: (C,).
    Returns (b, num_classes) f32 logits."""
    b = x_nchw.shape[0]
    d = x_nchw.shape[1] * x_nchw.shape[2] * x_nchw.shape[3]
    hidden = w1.shape[1]
    num_classes = w2.shape[1]
    n_pad = max(128, _round_up(num_classes, 128))  # lane-dense output width

    # flatten only (pure reshape of contiguous NCHW, same as torch .view);
    # x stays f32 -- no wrapper-side cast or pad pass through HBM.
    x_flat = x_nchw.reshape(b, d)

    # tiny, reused parameters: bf16 weights (MXU operands), f32 biases,
    # fc2 zero-padded to n_pad output lanes (sliced back below).
    w1_bf = w1.astype(jnp.bfloat16)
    w2_bf = jnp.pad(w2, ((0, 0), (0, n_pad - num_classes))).astype(jnp.bfloat16)
    b1_2d = b1.reshape(1, hidden).astype(jnp.float32)
    b2_2d = jnp.pad(b2, ((0, n_pad - num_classes),)).reshape(1, n_pad).astype(jnp.float32)

    tm = _pick_tm(b, d, n_pad, tm_max=tm_max)
    grid = (pl.cdiv(b, tm),)  # ragged last block: garbage rows are independent,
                              # their OOB output rows are dropped on writeback

    out_padded = pl.pallas_call(
        _mlp_kernel,
        out_shape=jax.ShapeDtypeStruct((b, n_pad), jnp.float32),
        grid=grid,
        in_specs=[
            # activations: tiled over batch
            pl.BlockSpec((tm, d), lambda i: (i, 0)),
            # weights / biases: constant block index -> stay VMEM-resident
            pl.BlockSpec((d, hidden), lambda i: (0, 0)),
            pl.BlockSpec((1, hidden), lambda i: (0, 0)),
            pl.BlockSpec((hidden, n_pad), lambda i: (0, 0)),
            pl.BlockSpec((1, n_pad), lambda i: (0, 0)),
        ],
        out_specs=pl.BlockSpec((tm, n_pad), lambda i: (i, 0)),
        compiler_params=pltpu.CompilerParams(
            # batch tiles are independent -> shard across cores (2x on v7x megacore)
            dimension_semantics=("parallel",),
        ),
    )(x_flat, w1_bf, b1_2d, w2_bf, b2_2d)

    # strip the padded logit lanes (batch was never padded)
    return out_padded[:, :num_classes]


if __name__ == "__main__":
    # Small shapes consistent with the module: 3 channels (fixed by fc1 = 3*h*w),
    # h = w = 16, hidden = 128 (fixed), num_classes = 6, batch = 2.
    B, C_IN, H, W = 2, 3, 16, 16
    NUM_CLASSES = 6
    D = C_IN * H * W  # 768

    key = jax.random.PRNGKey(0)
    kx, kw1, kb1, kw2, kb2 = jax.random.split(key, 5)

    x = jax.random.normal(kx, (B, C_IN, H, W), dtype=jnp.float32)

    # Parameters stored (in, out); torch stores (out, in) -- same math with x @ W.
    w1 = jax.random.normal(kw1, (D, HIDDEN), dtype=jnp.float32) * 0.02
    b1 = jax.random.normal(kb1, (HIDDEN,), dtype=jnp.float32) * 0.01
    w2 = jax.random.normal(kw2, (HIDDEN, NUM_CLASSES), dtype=jnp.float32) * 0.02
    b2 = jax.random.normal(kb2, (NUM_CLASSES,), dtype=jnp.float32) * 0.01

    logits = mlp_classifier_forward(x, w1, b1, w2, b2)
    jax.block_until_ready(logits)
    assert logits.shape == (B, NUM_CLASSES)

    # Reference 1: same bf16-operand / f32-accumulate math in plain JAX (tight check).
    x_bf = x.reshape(B, D).astype(jnp.bfloat16)
    h_ref = jnp.maximum(
        jnp.dot(x_bf, w1.astype(jnp.bfloat16), preferred_element_type=jnp.float32) + b1,
        0.0,
    )
    ref_bf = (
        jnp.dot(h_ref.astype(jnp.bfloat16), w2.astype(jnp.bfloat16),
                preferred_element_type=jnp.float32)
        + b2
    )
    assert jnp.allclose(logits, ref_bf, atol=2e-3, rtol=2e-3)

    # Reference 2: full f32 PyTorch-equivalent forward (loose check; bf16 operand rounding).
    ref_f32 = jnp.maximum(x.reshape(B, D) @ w1 + b1, 0.0) @ w2 + b2
    assert jnp.allclose(logits, ref_f32, atol=3e-2, rtol=3e-2)

    print("KERNEL_OK")
</pallas_src>

<mosaic_0001>
module attributes {stable_mosaic.version = 11 : i64} {
  func.func @_mlp_kernel(%arg0: i32, %arg1: memref<128x768xf32, #tpu.memory_space<vmem>>, %arg2: memref<768x128xbf16, #tpu.memory_space<vmem>>, %arg3: memref<1x128xf32, #tpu.memory_space<vmem>>, %arg4: memref<128x128xbf16, #tpu.memory_space<vmem>>, %arg5: memref<1x128xf32, #tpu.memory_space<vmem>>, %arg6: memref<128x128xf32, #tpu.memory_space<vmem>>) attributes {dimension_semantics = [#tpu.dimension_semantics<parallel>], iteration_bounds = array<i64: 1>, scalar_prefetch = 0 : i64, scratch_operands = 0 : i64, tpu.core_type = #tpu.core_type<tc>, window_params = [{transform_indices = @transform_0, window_bounds = array<i64: 128, 768>}, {pipeline_mode = #tpu.pipeline_mode<synchronous>, transform_indices = @transform_1, window_bounds = array<i64: 768, 128>}, {pipeline_mode = #tpu.pipeline_mode<synchronous>, transform_indices = @transform_2, window_bounds = array<i64: 1, 128>}, {pipeline_mode = #tpu.pipeline_mode<synchronous>, transform_indices = @transform_3, window_bounds = array<i64: 128, 128>}, {pipeline_mode = #tpu.pipeline_mode<synchronous>, transform_indices = @transform_4, window_bounds = array<i64: 1, 128>}, {transform_indices = @transform_5, window_bounds = array<i64: 128, 128>}]} {
    %c0 = arith.constant 0 : index
    %c0_0 = arith.constant 0 : index
    %0 = vector.load %arg1[%c0, %c0_0] : memref<128x768xf32, #tpu.memory_space<vmem>>, vector<128x768xf32>
    %1 = arith.truncf %0 : vector<128x768xf32> to vector<128x768xbf16>
    %c0_1 = arith.constant 0 : index
    %c0_2 = arith.constant 0 : index
    %2 = vector.load %arg2[%c0_1, %c0_2] : memref<768x128xbf16, #tpu.memory_space<vmem>>, vector<768x128xbf16>
    %cst = arith.constant dense<0.000000e+00> : vector<128x128xf32>
    %3 = tpu.matmul %1, %2, %cst {dimension_numbers = #tpu.dot_dimension_numbers<[1], [0], [0], [1], [0, 0, 1, 1], [], []>} : vector<128x768xbf16>, vector<768x128xbf16>, vector<128x128xf32> -> vector<128x128xf32>
    %c0_3 = arith.constant 0 : index
    %c0_4 = arith.constant 0 : index
    %4 = vector.load %arg3[%c0_3, %c0_4] : memref<1x128xf32, #tpu.memory_space<vmem>>, vector<1x128xf32>
    %5 = vector.broadcast %4 : vector<1x128xf32> to vector<128x128xf32>
    %6 = arith.addf %3, %5 : vector<128x128xf32>
    %cst_5 = arith.constant 0.000000e+00 : f32
    %7 = vector.broadcast %cst_5 : f32 to vector<128x128xf32>
    %8 = arith.maximumf %6, %7 : vector<128x128xf32>
    %9 = arith.truncf %8 : vector<128x128xf32> to vector<128x128xbf16>
    %c0_6 = arith.constant 0 : index
    %c0_7 = arith.constant 0 : index
    %10 = vector.load %arg4[%c0_6, %c0_7] : memref<128x128xbf16, #tpu.memory_space<vmem>>, vector<128x128xbf16>
    %cst_8 = arith.constant dense<0.000000e+00> : vector<128x128xf32>
    %11 = tpu.matmul %9, %10, %cst_8 {dimension_numbers = #tpu.dot_dimension_numbers<[1], [0], [0], [1], [0, 0, 1, 1], [], []>} : vector<128x128xbf16>, vector<128x128xbf16>, vector<128x128xf32> -> vector<128x128xf32>
    %c0_9 = arith.constant 0 : index
    %c0_10 = arith.constant 0 : index
    %12 = vector.load %arg5[%c0_9, %c0_10] : memref<1x128xf32, #tpu.memory_space<vmem>>, vector<1x128xf32>
    %13 = vector.broadcast %12 : vector<1x128xf32> to vector<128x128xf32>
    %14 = arith.addf %11, %13 : vector<128x128xf32>
    %c0_11 = arith.constant 0 : index
    %c0_12 = arith.constant 0 : index
    %15 = vector.load %arg6[%c0_11, %c0_12] : memref<128x128xf32, #tpu.memory_space<vmem>>, vector<128x128xf32>
    tpu.vector_store %arg6[%c0_11, %c0_12], %14 {strides = array<i32>} : memref<128x128xf32, #tpu.memory_space<vmem>>, vector<128x128xf32>,
    return
  }
  func.func @transform_0(%arg0: i32) -> (i32, i32) {
    %c0_i32 = arith.constant 0 : i32
    %c0_i32_0 = arith.constant 0 : i32
    return %arg0, %c0_i32 : i32, i32
  }
  func.func @transform_1(%arg0: i32) -> (i32, i32) {
    %c0_i32 = arith.constant 0 : i32
    %c0_i32_0 = arith.constant 0 : i32
    %c0_i32_1 = arith.constant 0 : i32
    return %c0_i32, %c0_i32_0 : i32, i32
  }
  func.func @transform_2(%arg0: i32) -> (i32, i32) {
    %c0_i32 = arith.constant 0 : i32
    %c0_i32_0 = arith.constant 0 : i32
    %c0_i32_1 = arith.constant 0 : i32
    return %c0_i32, %c0_i32_0 : i32, i32
  }
  func.func @transform_3(%arg0: i32) -> (i32, i32) {
    %c0_i32 = arith.constant 0 : i32
    %c0_i32_0 = arith.constant 0 : i32
    %c0_i32_1 = arith.constant 0 : i32
    return %c0_i32, %c0_i32_0 : i32, i32
  }
  func.func @transform_4(%arg0: i32) -> (i32, i32) {
    %c0_i32 = arith.constant 0 : i32
    %c0_i32_0 = arith.constant 0 : i32
    %c0_i32_1 = arith.constant 0 : i32
    return %c0_i32, %c0_i32_0 : i32, i32
  }
  func.func @transform_5(%arg0: i32) -> (i32, i32) {
    %c0_i32 = arith.constant 0 : i32
    %c0_i32_0 = arith.constant 0 : i32
    return %arg0, %c0_i32 : i32, i32
  }
}

</mosaic_0001>

<llo_original>
// kernel: tpu_custom_call.1
$region0: #{tpu_custom_call.1}
  #allocation0 [shape = 'u32[]', space=smem, size = 0x4, offset = 0x4, fixed_abs, tag = 'smem constant byte address 0x4 - core index']
  #allocation1 [shape = 'u32[144,128]{1,0:T(1,128)}', space=vmem, size = 0x12000, scoped, tag = 'internal scratch']
  %s0 = inlined_call_operand.hbm [shape: f32[2,768], index: 0, kind: input, shape index: {}]
  %s1 = inlined_call_operand.hbm [shape: bf16[768,128], index: 1, kind: input, shape index: {}]
  %s2 = inlined_call_operand.vmem [shape: f32[1,128], index: 2, kind: input, shape index: {}]
  %s3 = inlined_call_operand.hbm [shape: bf16[128,128], index: 3, kind: input, shape index: {}]
  %s4 = inlined_call_operand.vmem [shape: f32[1,128], index: 4, kind: input, shape index: {}]
  %s5 = inlined_call_operand.hbm [shape: f32[2,128], index: 5, kind: output, shape index: {}]
  %s6 = sld [smem:[#allocation0]]
  $region42: #{tpu_custom_call.1} parent=0
    _
  %s8 = ssub.s32 1, %s6
  %s9 = scalar_select 0, %s8, %s6
  $region1: #{tpu_custom_call.1} parent=0
    #allocation2 [shape = 'u8[393216]{0}', space=vmem, size = 0x60000, scoped, tag = 'input window, operand 0, single buffered']
    #allocation3 [shape = 's32[1]{0}', space=sflag, size = 0x4, scoped, tag = 'scoped memory for tpu_custom_call.1']
    #allocation4 [shape = 's32[1]{0}', space=sflag, size = 0x4, scoped, tag = 'scoped memory for tpu_custom_call.1']
    #allocation5 [shape = 'u8[196608]{0}', space=vmem, size = 0x30000, scoped, tag = 'input window, operand 1, single buffered']
    #allocation6 [shape = 's32[1]{0}', space=sflag, size = 0x4, scoped, tag = 'scoped memory for tpu_custom_call.1']
    #allocation7 [shape = 'u8[32768]{0}', space=vmem, size = 0x8000, scoped, tag = 'input window, operand 3, single buffered']
    #allocation8 [shape = 'u8[65536]{0}', space=vmem, size = 0x10000, scoped, tag = 'output window, operand 0, single buffered']
    %10 = vsyncpa [#allocation3], 0
    %11 = vsyncpa [#allocation6], 0
    %12 = vsyncpa [#allocation4], 0
    // Predicated region
    $region2: #{tpu_custom_call.1} parent=1 // pred_check
      _
    $region3: #{tpu_custom_call.1} parent=1 // pred_check_branch
      %14 = sbr.rel (0) target = $region5
    $region4: #{tpu_custom_call.1} parent=1 // pred_region
      %s16 = ssub.s32 12288, 192
      %17 = vsyncadd [#allocation3], %s16
      %s18 = sshll.u32 [#allocation2], 4
      %s19 = int_to_ptr.vmem [resolvable:$true] %s18
      %24 = dma.hbm_to_vmem [thread:$0]  %s0, 192, %s19, [#allocation3], 192, 192, 12
    $region5: #{tpu_custom_call.1} parent=1 // pred_fallthru
      _
    // Predicated region
    $region6: #{tpu_custom_call.1} parent=1 // pred_check
      _
    $region7: #{tpu_custom_call.1} parent=1 // pred_check_branch
      %26 = sbr.rel (0) target = $region9
    $region8: #{tpu_custom_call.1} parent=1 // pred_region
      %s28 = ssub.s32 6144, 6144
      %29 = vsyncadd [#allocation6], %s28
      %s30 = sshll.u32 [#allocation5], 4
      %s31 = int_to_ptr.vmem [resolvable:$true] %s30
      %36 = dma.hbm_to_vmem [thread:$0]  %s1, 6144, %s31, [#allocation6], 64, 64, 4
    $region9: #{tpu_custom_call.1} parent=1 // pred_fallthru
      _
    // Predicated region
    $region10: #{tpu_custom_call.1} parent=1 // pred_check
      _
    $region11: #{tpu_custom_call.1} parent=1 // pred_check_branch
      %38 = sbr.rel (0) target = $region13
    $region12: #{tpu_custom_call.1} parent=1 // pred_region
      _
    $region13: #{tpu_custom_call.1} parent=1 // pred_fallthru
      _
    // Predicated region
    $region14: #{tpu_custom_call.1} parent=1 // pred_check
      _
    $region15: #{tpu_custom_call.1} parent=1 // pred_check_branch
      %40 = sbr.rel (0) target = $region17
    $region16: #{tpu_custom_call.1} parent=1 // pred_region
      %s42 = ssub.s32 1024, 1024
      %43 = vsyncadd [#allocation6], %s42
      %s44 = sshll.u32 [#allocation7], 4
      %s45 = int_to_ptr.vmem [resolvable:$true] %s44
      %50 = dma.hbm_to_vmem [thread:$0]  %s3, 1024, %s45, [#allocation6], 64, 64, 4
    $region17: #{tpu_custom_call.1} parent=1 // pred_fallthru
      _
    // Predicated region
    $region18: #{tpu_custom_call.1} parent=1 // pred_check
      _
    $region19: #{tpu_custom_call.1} parent=1 // pred_check_branch
      %52 = sbr.rel (0) target = $region21
    $region20: #{tpu_custom_call.1} parent=1 // pred_region
      _
    $region21: #{tpu_custom_call.1} parent=1 // pred_fallthru
      _
    // Predicated region
    $region22: #{tpu_custom_call.1} parent=1 // pred_check
      _
    $region23: #{tpu_custom_call.1} parent=1 // pred_check_branch
      %54 = sbr.rel (0) target = $region25
    $region24: #{tpu_custom_call.1} parent=1 // pred_region
      %55 = dma.done [#allocation3], 12288
    $region25: #{tpu_custom_call.1} parent=1 // pred_fallthru
      _
    // Predicated region
    $region26: #{tpu_custom_call.1} parent=1 // pred_check
      _
    $region27: #{tpu_custom_call.1} parent=1 // pred_check_branch
      %57 = sbr.rel (0) target = $region29
    $region28: #{tpu_custom_call.1} parent=1 // pred_region
      %58 = dma.done [#allocation6], 6144
    $region29: #{tpu_custom_call.1} parent=1 // pred_fallthru
      _
    // Predicated region
    $region30: #{tpu_custom_call.1} parent=1 // pred_check
      _
    $region31: #{tpu_custom_call.1} parent=1 // pred_check_branch
      %60 = sbr.rel (0) target = $region33
    $region32: #{tpu_custom_call.1} parent=1 // pred_region
      %61 = dma.done [#allocation6], 1024
    $region33: #{tpu_custom_call.1} parent=1 // pred_fallthru
      _
    %v63 = vld [vmem:[#allocation2] sm:$0xff]
    %v64 = vld [vmem:[#allocation2 + $0x8] sm:$0xf]
    %v65 = vld [vmem:[#allocation2 + $0xc] sm:$0xff]
    %v66 = vld [vmem:[#allocation2 + $0x14] sm:$0xf]
    %v67 = vld [vmem:[#allocation2 + $0x18] sm:$0xff]
    %v68 = vld [vmem:[#allocation2 + $0x20] sm:$0xf]
    %v69 = vld [vmem:[#allocation2 + $0x24] sm:$0xff]
    %v70 = vld [vmem:[#allocation2 + $0x2c] sm:$0xf]
    %v71 = vld [vmem:[#allocation2 + $0x30] sm:$0xff]
    %v72 = vld [vmem:[#allocation2 + $0x38] sm:$0xf]
    %v73 = vld [vmem:[#allocation2 + $0x3c] sm:$0xff]
    %v74 = vld [vmem:[#allocation2 + $0x44] sm:$0xf]
    %v75 = vld [vmem:[#allocation2 + $0x48] sm:$0xff]
    %v76 = vld [vmem:[#allocation2 + $0x50] sm:$0xf]
    %v77 = vld [vmem:[#allocation2 + $0x54] sm:$0xff]
    %v78 = vld [vmem:[#allocation2 + $0x5c] sm:$0xf]
    %v79 = vld [vmem:[#allocation2 + $0x60] sm:$0xff]
    %v80 = vld [vmem:[#allocation2 + $0x68] sm:$0xf]
    %v81 = vld [vmem:[#allocation2 + $0x6c] sm:$0xff]
    %v82 = vld [vmem:[#allocation2 + $0x74] sm:$0xf]
    %v83 = vld [vmem:[#allocation2 + $0x78] sm:$0xff]
    %v84 = vld [vmem:[#allocation2 + $0x80] sm:$0xf]
    %v85 = vld [vmem:[#allocation2 + $0x84] sm:$0xff]
    %v86 = vld [vmem:[#allocation2 + $0x8c] sm:$0xf]
    %v87 = vld [vmem:[#allocation2 + $0x90] sm:$0xff]
    %v88 = vld [vmem:[#allocation2 + $0x98] sm:$0xf]
    %v89 = vld [vmem:[#allocation2 + $0x9c] sm:$0xff]
    %v90 = vld [vmem:[#allocation2 + $0xa4] sm:$0xf]
    %v91 = vld [vmem:[#allocation2 + $0xa8] sm:$0xff]
    %v92 = vld [vmem:[#allocation2 + $0xb0] sm:$0xf]
    %v93 = vld [vmem:[#allocation2 + $0xb4] sm:$0xff]
    %v94 = vld [vmem:[#allocation2 + $0xbc] sm:$0xf]
    %v95 = vld [vmem:[#allocation2 + $0xc0] sm:$0xff]
    %v96 = vld [vmem:[#allocation2 + $0xc8] sm:$0xf]
    %v97 = vld [vmem:[#allocation2 + $0xcc] sm:$0xff]
    %v98 = vld [vmem:[#allocation2 + $0xd4] sm:$0xf]
    %v99 = vld [vmem:[#allocation2 + $0xd8] sm:$0xff]
    %v100 = vld [vmem:[#allocation2 + $0xe0] sm:$0xf]
    %v101 = vld [vmem:[#allocation2 + $0xe4] sm:$0xff]
    %v102 = vld [vmem:[#allocation2 + $0xec] sm:$0xf]
    %v103 = vld [vmem:[#allocation2 + $0xf0] sm:$0xff]
    %v104 = vld [vmem:[#allocation2 + $0xf8] sm:$0xf]
    %v105 = vld [vmem:[#allocation2 + $0xfc] sm:$0xff]
    %v106 = vld [vmem:[#allocation2 + $0x104] sm:$0xf]
    %v107 = vld [vmem:[#allocation2 + $0x108] sm:$0xff]
    %v108 = vld [vmem:[#allocation2 + $0x110] sm:$0xf]
    %v109 = vld [vmem:[#allocation2 + $0x114] sm:$0xff]
    %v110 = vld [vmem:[#allocation2 + $0x11c] sm:$0xf]
    %v111 = vld [vmem:[#allocation2 + $0x120] sm:$0xff]
    %v112 = vld [vmem:[#allocation2 + $0x128] sm:$0xf]
    %v113 = vld [vmem:[#allocation2 + $0x12c] sm:$0xff]
    %v114 = vld [vmem:[#allocation2 + $0x134] sm:$0xf]
    %v115 = vld [vmem:[#allocation2 + $0x138] sm:$0xff]
    %v116 = vld [vmem:[#allocation2 + $0x140] sm:$0xf]
    %v117 = vld [vmem:[#allocation2 + $0x144] sm:$0xff]
    %v118 = vld [vmem:[#allocation2 + $0x14c] sm:$0xf]
    %v119 = vld [vmem:[#allocation2 + $0x150] sm:$0xff]
    %v120 = vld [vmem:[#allocation2 + $0x158] sm:$0xf]
    %v121 = vld [vmem:[#allocation2 + $0x15c] sm:$0xff]
    %v122 = vld [vmem:[#allocation2 + $0x164] sm:$0xf]
    %v123 = vld [vmem:[#allocation2 + $0x168] sm:$0xff]
    %v124 = vld [vmem:[#allocation2 + $0x170] sm:$0xf]
    %v125 = vld [vmem:[#allocation2 + $0x174] sm:$0xff]
    %v126 = vld [vmem:[#allocation2 + $0x17c] sm:$0xf]
    %v127 = vld [vmem:[#allocation2 + $0x180] sm:$0xff]
    %v128 = vld [vmem:[#allocation2 + $0x188] sm:$0xf]
    %v129 = vld [vmem:[#allocation2 + $0x18c] sm:$0xff]
    %v130 = vld [vmem:[#allocation2 + $0x194] sm:$0xf]
    %v131 = vld [vmem:[#allocation2 + $0x198] sm:$0xff]
    %v132 = vld [vmem:[#allocation2 + $0x1a0] sm:$0xf]
    %v133 = vld [vmem:[#allocation2 + $0x1a4] sm:$0xff]
    %v134 = vld [vmem:[#allocation2 + $0x1ac] sm:$0xf]
    %v135 = vld [vmem:[#allocation2 + $0x1b0] sm:$0xff]
    %v136 = vld [vmem:[#allocation2 + $0x1b8] sm:$0xf]
    %v137 = vld [vmem:[#allocation2 + $0x1bc] sm:$0xff]
    %v138 = vld [vmem:[#allocation2 + $0x1c4] sm:$0xf]
    %v139 = vld [vmem:[#allocation2 + $0x1c8] sm:$0xff]
    %v140 = vld [vmem:[#allocation2 + $0x1d0] sm:$0xf]
    %v141 = vld [vmem:[#allocation2 + $0x1d4] sm:$0xff]
    %v142 = vld [vmem:[#allocation2 + $0x1dc] sm:$0xf]
    %v143 = vld [vmem:[#allocation2 + $0x1e0] sm:$0xff]
    %v144 = vld [vmem:[#allocation2 + $0x1e8] sm:$0xf]
    %v145 = vld [vmem:[#allocation2 + $0x1ec] sm:$0xff]
    %v146 = vld [vmem:[#allocation2 + $0x1f4] sm:$0xf]
    %v147 = vld [vmem:[#allocation2 + $0x1f8] sm:$0xff]
    %v148 = vld [vmem:[#allocation2 + $0x200] sm:$0xf]
    %v149 = vld [vmem:[#allocation2 + $0x204] sm:$0xff]
    %v150 = vld [vmem:[#allocation2 + $0x20c] sm:$0xf]
    %v151 = vld [vmem:[#allocation2 + $0x210] sm:$0xff]
    %v152 = vld [vmem:[#allocation2 + $0x218] sm:$0xf]
    %v153 = vld [vmem:[#allocation2 + $0x21c] sm:$0xff]
    %v154 = vld [vmem:[#allocation2 + $0x224] sm:$0xf]
    %v155 = vld [vmem:[#allocation2 + $0x228] sm:$0xff]
    %v156 = vld [vmem:[#allocation2 + $0x230] sm:$0xf]
    %v157 = vld [vmem:[#allocation2 + $0x234] sm:$0xff]
    %v158 = vld [vmem:[#allocation2 + $0x23c] sm:$0xf]
    %v159 = vld [vmem:[#allocation2 + $0x240] sm:$0xff]
    %v160 = vld [vmem:[#allocation2 + $0x248] sm:$0xf]
    %v161 = vld [vmem:[#allocation2 + $0x24c] sm:$0xff]
    %v162 = vld [vmem:[#allocation2 + $0x254] sm:$0xf]
    %v163 = vld [vmem:[#allocation2 + $0x258] sm:$0xff]
    %v164 = vld [vmem:[#allocation2 + $0x260] sm:$0xf]
    %v165 = vld [vmem:[#allocation2 + $0x264] sm:$0xff]
    %v166 = vld [vmem:[#allocation2 + $0x26c] sm:$0xf]
    %v167 = vld [vmem:[#allocation2 + $0x270] sm:$0xff]
    %v168 = vld [vmem:[#allocation2 + $0x278] sm:$0xf]
    %v169 = vld [vmem:[#allocation2 + $0x27c] sm:$0xff]
    %v170 = vld [vmem:[#allocation2 + $0x284] sm:$0xf]
    %v171 = vld [vmem:[#allocation2 + $0x288] sm:$0xff]
    %v172 = vld [vmem:[#allocation2 + $0x290] sm:$0xf]
    %v173 = vld [vmem:[#allocation2 + $0x294] sm:$0xff]
    %v174 = vld [vmem:[#allocation2 + $0x29c] sm:$0xf]
    %v175 = vld [vmem:[#allocation2 + $0x2a0] sm:$0xff]
    %v176 = vld [vmem:[#allocation2 + $0x2a8] sm:$0xf]
    %v177 = vld [vmem:[#allocation2 + $0x2ac] sm:$0xff]
    %v178 = vld [vmem:[#allocation2 + $0x2b4] sm:$0xf]
    %v179 = vld [vmem:[#allocation2 + $0x2b8] sm:$0xff]
    %v180 = vld [vmem:[#allocation2 + $0x2c0] sm:$0xf]
    %v181 = vld [vmem:[#allocation2 + $0x2c4] sm:$0xff]
    %v182 = vld [vmem:[#allocation2 + $0x2cc] sm:$0xf]
    %v183 = vld [vmem:[#allocation2 + $0x2d0] sm:$0xff]
    %v184 = vld [vmem:[#allocation2 + $0x2d8] sm:$0xf]
    %v185 = vld [vmem:[#allocation2 + $0x2dc] sm:$0xff]
    %v186 = vld [vmem:[#allocation2 + $0x2e4] sm:$0xf]
    %v187 = vld [vmem:[#allocation2 + $0x2e8] sm:$0xff]
    %v188 = vld [vmem:[#allocation2 + $0x2f0] sm:$0xf]
    %v189 = vld [vmem:[#allocation2 + $0x2f4] sm:$0xff]
    %v190 = vld [vmem:[#allocation2 + $0x2fc] sm:$0xf]
    %v319 = vcombine.low %v63, %v65
    %v320 = vcombine.high %v63, %v65
    %v321 = vcombine.low %v67, %v69
    %v322 = vcombine.high %v67, %v69
    %v324 = vunpack.c.l.s4 1983009808
    %v325 = vunpack.c.0.s8 %v324
    %v326 = vlaneseq
    %v327 = vshrl.u32 %v326, 7
    %v328 = vsub.s32 %v325, %v327
    %v329 = vrot.slane %v319, %v328
    %v331 = vunpack.c.l.s4 1983009808
    %v332 = vunpack.c.0.s8 %v331
    %v333 = vlaneseq
    %v334 = vshrl.u32 %v333, 7
    %v335 = vsub.s32 %v332, %v334
    %v336 = vrot.slane %v320, %v335
    %v338 = vunpack.c.l.s4 1983009808
    %v339 = vunpack.c.0.s8 %v338
    %v340 = vlaneseq
    %v341 = vshrl.u32 %v340, 7
    %v342 = vsub.s32 %v339, %v341
    %v343 = vrot.slane %v321, %v342
    %v345 = vunpack.c.l.s4 1983009808
    %v346 = vunpack.c.0.s8 %v345
    %v347 = vlaneseq
    %v348 = vshrl.u32 %v347, 7
    %v349 = vsub.s32 %v346, %v348
    %v350 = vrot.slane %v322, %v349
    %v351 = vcombine.low %v329, %v343
    %v352 = vcombine.high %v329, %v343
    %v353 = vcombine.low %v336, %v350
    %v354 = vcombine.high %v336, %v350
    %v355 = vcombine.low %v64, %v66
    %v356 = vcombine.low %v68, %v70
    %v358 = vunpack.c.l.s4 1983009808
    %v359 = vunpack.c.0.s8 %v358
    %v360 = vlaneseq
    %v361 = vshrl.u32 %v360, 7
    %v362 = vsub.s32 %v359, %v361
    %v363 = vrot.slane %v355, %v362
    %v365 = vunpack.c.l.s4 1983009808
    %v366 = vunpack.c.0.s8 %v365
    %v367 = vlaneseq
    %v368 = vshrl.u32 %v367, 7
    %v369 = vsub.s32 %v366, %v368
    %v370 = vrot.slane %v356, %v369
    %v371 = vcombine.low %v363, %v370
    %v372 = vcombine.high %v363, %v370
    %v373 = vcombine.low %v71, %v73
    %v374 = vcombine.high %v71, %v73
    %v375 = vcombine.low %v75, %v77
    %v376 = vcombine.high %v75, %v77
    %v378 = vunpack.c.l.s4 1983009808
    %v379 = vunpack.c.0.s8 %v378
    %v380 = vlaneseq
    %v381 = vshrl.u32 %v380, 7
    %v382 = vsub.s32 %v379, %v381
    %v383 = vrot.slane %v373, %v382
    %v385 = vunpack.c.l.s4 1983009808
    %v386 = vunpack.c.0.s8 %v385
    %v387 = vlaneseq
    %v388 = vshrl.u32 %v387, 7
    %v389 = vsub.s32 %v386, %v388
    %v390 = vrot.slane %v374, %v389
    %v392 = vunpack.c.l.s4 1983009808
    %v393 = vunpack.c.0.s8 %v392
    %v394 = vlaneseq
    %v395 = vshrl.u32 %v394, 7
    %v396 = vsub.s32 %v393, %v395
    %v397 = vrot.slane %v375, %v396
    %v399 = vunpack.c.l.s4 1983009808
    %v400 = vunpack.c.0.s8 %v399
    %v401 = vlaneseq
    %v402 = vshrl.u32 %v401, 7
    %v403 = vsub.s32 %v400, %v402
    %v404 = vrot.slane %v376, %v403
    %v405 = vcombine.low %v383, %v397
    %v406 = vcombine.high %v383, %v397
    %v407 = vcombine.low %v390, %v404
    %v408 = vcombine.high %v390, %v404
    %v409 = vcombine.low %v72, %v74
    %v410 = vcombine.low %v76, %v78
    %v412 = vunpack.c.l.s4 1983009808
    %v413 = vunpack.c.0.s8 %v412
    %v414 = vlaneseq
    %v415 = vshrl.u32 %v414, 7
    %v416 = vsub.s32 %v413, %v415
    %v417 = vrot.slane %v409, %v416
    %v419 = vunpack.c.l.s4 1983009808
    %v420 = vunpack.c.0.s8 %v419
    %v421 = vlaneseq
    %v422 = vshrl.u32 %v421, 7
    %v423 = vsub.s32 %v420, %v422
    %v424 = vrot.slane %v410, %v423
    %v425 = vcombine.low %v417, %v424
    %v426 = vcombine.high %v417, %v424
    %v427 = vcombine.low %v79, %v81
    %v428 = vcombine.high %v79, %v81
    %v429 = vcombine.low %v83, %v85
    %v430 = vcombine.high %v83, %v85
    %v432 = vunpack.c.l.s4 1983009808
    %v433 = vunpack.c.0.s8 %v432
    %v434 = vlaneseq
    %v435 = vshrl.u32 %v434, 7
    %v436 = vsub.s32 %v433, %v435
    %v437 = vrot.slane %v427, %v436
    %v439 = vunpack.c.l.s4 1983009808
    %v440 = vunpack.c.0.s8 %v439
    %v441 = vlaneseq
    %v442 = vshrl.u32 %v441, 7
    %v443 = vsub.s32 %v440, %v442
    %v444 = vrot.slane %v428, %v443
    %v446 = vunpack.c.l.s4 1983009808
    %v447 = vunpack.c.0.s8 %v446
    %v448 = vlaneseq
    %v449 = vshrl.u32 %v448, 7
    %v450 = vsub.s32 %v447, %v449
    %v451 = vrot.slane %v429, %v450
    %v453 = vunpack.c.l.s4 1983009808
    %v454 = vunpack.c.0.s8 %v453
    %v455 = vlaneseq
    %v456 = vshrl.u32 %v455, 7
    %v457 = vsub.s32 %v454, %v456
    %v458 = vrot.slane %v430, %v457
    %v459 = vcombine.low %v437, %v451
    %v460 = vcombine.high %v437, %v451
    %v461 = vcombine.low %v444, %v458
    %v462 = vcombine.high %v444, %v458
    %v463 = vcombine.low %v80, %v82
    %v464 = vcombine.low %v84, %v86
    %v466 = vunpack.c.l.s4 1983009808
    %v467 = vunpack.c.0.s8 %v466
    %v468 = vlaneseq
    %v469 = vshrl.u32 %v468, 7
    %v470 = vsub.s32 %v467, %v469
    %v471 = vrot.slane %v463, %v470
    %v473 = vunpack.c.l.s4 1983009808
    %v474 = vunpack.c.0.s8 %v473
    %v475 = vlaneseq
    %v476 = vshrl.u32 %v475, 7
    %v477 = vsub.s32 %v474, %v476
    %v478 = vrot.slane %v464, %v477
    %v479 = vcombine.low %v471, %v478
    %v480 = vcombine.high %v471, %v478
    %v481 = vcombine.low %v87, %v89
    %v482 = vcombine.high %v87, %v89
    %v483 = vcombine.low %v91, %v93
    %v484 = vcombine.high %v91, %v93
    %v486 = vunpack.c.l.s4 1983009808
    %v487 = vunpack.c.0.s8 %v486
    %v488 = vlaneseq
    %v489 = vshrl.u32 %v488, 7
    %v490 = vsub.s32 %v487, %v489
    %v491 = vrot.slane %v481, %v490
    %v493 = vunpack.c.l.s4 1983009808
    %v494 = vunpack.c.0.s8 %v493
    %v495 = vlaneseq
    %v496 = vshrl.u32 %v495, 7
    %v497 = vsub.s32 %v494, %v496
    %v498 = vrot.slane %v482, %v497
    %v500 = vunpack.c.l.s4 1983009808
    %v501 = vunpack.c.0.s8 %v500
    %v502 = vlaneseq
    %v503 = vshrl.u32 %v502, 7
    %v504 = vsub.s32 %v501, %v503
    %v505 = vrot.slane %v483, %v504
    %v507 = vunpack.c.l.s4 1983009808
    %v508 = vunpack.c.0.s8 %v507
    %v509 = vlaneseq
    %v510 = vshrl.u32 %v509, 7
    %v511 = vsub.s32 %v508, %v510
    %v512 = vrot.slane %v484, %v511
    %v513 = vcombine.low %v491, %v505
    %v514 = vcombine.high %v491, %v505
    %v515 = vcombine.low %v498, %v512
    %v516 = vcombine.high %v498, %v512
    %v517 = vcombine.low %v88, %v90
    %v518 = vcombine.low %v92, %v94
    %v520 = vunpack.c.l.s4 1983009808
    %v521 = vunpack.c.0.s8 %v520
    %v522 = vlaneseq
    %v523 = vshrl.u32 %v522, 7
    %v524 = vsub.s32 %v521, %v523
    %v525 = vrot.slane %v517, %v524
    %v527 = vunpack.c.l.s4 1983009808
    %v528 = vunpack.c.0.s8 %v527
    %v529 = vlaneseq
    %v530 = vshrl.u32 %v529, 7
    %v531 = vsub.s32 %v528, %v530
    %v532 = vrot.slane %v518, %v531
    %v533 = vcombine.low %v525, %v532
    %v534 = vcombine.high %v525, %v532
    %v535 = vcombine.low %v95, %v97
    %v536 = vcombine.high %v95, %v97
    %v537 = vcombine.low %v99, %v101
    %v538 = vcombine.high %v99, %v101
    %v540 = vunpack.c.l.s4 1983009808
    %v541 = vunpack.c.0.s8 %v540
    %v542 = vlaneseq
    %v543 = vshrl.u32 %v542, 7
    %v544 = vsub.s32 %v541, %v543
    %v545 = vrot.slane %v535, %v544
    %v547 = vunpack.c.l.s4 1983009808
    %v548 = vunpack.c.0.s8 %v547
    %v549 = vlaneseq
    %v550 = vshrl.u32 %v549, 7
    %v551 = vsub.s32 %v548, %v550
    %v552 = vrot.slane %v536, %v551
    %v554 = vunpack.c.l.s4 1983009808
    %v555 = vunpack.c.0.s8 %v554
    %v556 = vlaneseq
    %v557 = vshrl.u32 %v556, 7
    %v558 = vsub.s32 %v555, %v557
    %v559 = vrot.slane %v537, %v558
    %v561 = vunpack.c.l.s4 1983009808
    %v562 = vunpack.c.0.s8 %v561
    %v563 = vlaneseq
    %v564 = vshrl.u32 %v563, 7
    %v565 = vsub.s32 %v562, %v564
    %v566 = vrot.slane %v538, %v565
    %v567 = vcombine.low %v545, %v559
    %v568 = vcombine.high %v545, %v559
    %v569 = vcombine.low %v552, %v566
    %v570 = vcombine.high %v552, %v566
    %v571 = vcombine.low %v96, %v98
    %v572 = vcombine.low %v100, %v102
    %v574 = vunpack.c.l.s4 1983009808
    %v575 = vunpack.c.0.s8 %v574
    %v576 = vlaneseq
    %v577 = vshrl.u32 %v576, 7
    %v578 = vsub.s32 %v575, %v577
    %v579 = vrot.slane %v571, %v578
    %v581 = vunpack.c.l.s4 1983009808
    %v582 = vunpack.c.0.s8 %v581
    %v583 = vlaneseq
    %v584 = vshrl.u32 %v583, 7
    %v585 = vsub.s32 %v582, %v584
    %v586 = vrot.slane %v572, %v585
    %v587 = vcombine.low %v579, %v586
    %v588 = vcombine.high %v579, %v586
    %v589 = vcombine.low %v103, %v105
    %v590 = vcombine.high %v103, %v105
    %v591 = vcombine.low %v107, %v109
    %v592 = vcombine.high %v107, %v109
    %v594 = vunpack.c.l.s4 1983009808
    %v595 = vunpack.c.0.s8 %v594
    %v596 = vlaneseq
    %v597 = vshrl.u32 %v596, 7
    %v598 = vsub.s32 %v595, %v597
    %v599 = vrot.slane %v589, %v598
    %v601 = vunpack.c.l.s4 1983009808
    %v602 = vunpack.c.0.s8 %v601
    %v603 = vlaneseq
    %v604 = vshrl.u32 %v603, 7
    %v605 = vsub.s32 %v602, %v604
    %v606 = vrot.slane %v590, %v605
    %v608 = vunpack.c.l.s4 1983009808
    %v609 = vunpack.c.0.s8 %v608
    %v610 = vlaneseq
    %v611 = vshrl.u32 %v610, 7
    %v612 = vsub.s32 %v609, %v611
    %v613 = vrot.slane %v591, %v612
    %v615 = vunpack.c.l.s4 1983009808
    %v616 = vunpack.c.0.s8 %v615
    %v617 = vlaneseq
    %v618 = vshrl.u32 %v617, 7
    %v619 = vsub.s32 %v616, %v618
    %v620 = vrot.slane %v592, %v619
    %v621 = vcombine.low %v599, %v613
    %v622 = vcombine.high %v599, %v613
    %v623 = vcombine.low %v606, %v620
    %v624 = vcombine.high %v606, %v620
    %v625 = vcombine.low %v104, %v106
    %v626 = vcombine.low %v108, %v110
    %v628 = vunpack.c.l.s4 1983009808
    %v629 = vunpack.c.0.s8 %v628
    %v630 = vlaneseq
    %v631 = vshrl.u32 %v630, 7
    %v632 = vsub.s32 %v629, %v631
    %v633 = vrot.slane %v625, %v632
    %v635 = vunpack.c.l.s4 1983009808
    %v636 = vunpack.c.0.s8 %v635
    %v637 = vlaneseq
    %v638 = vshrl.u32 %v637, 7
    %v639 = vsub.s32 %v636, %v638
    %v640 = vrot.slane %v626, %v639
    %v641 = vcombine.low %v633, %v640
    %v642 = vcombine.high %v633, %v640
    %v643 = vcombine.low %v111, %v113
    %v644 = vcombine.high %v111, %v113
    %v645 = vcombine.low %v115, %v117
    %v646 = vcombine.high %v115, %v117
    %v648 = vunpack.c.l.s4 1983009808
    %v649 = vunpack.c.0.s8 %v648
    %v650 = vlaneseq
    %v651 = vshrl.u32 %v650, 7
    %v652 = vsub.s32 %v649, %v651
    %v653 = vrot.slane %v643, %v652
    %v655 = vunpack.c.l.s4 1983009808
    %v656 = vunpack.c.0.s8 %v655
    %v657 = vlaneseq
    %v658 = vshrl.u32 %v657, 7
    %v659 = vsub.s32 %v656, %v658
    %v660 = vrot.slane %v644, %v659
    %v662 = vunpack.c.l.s4 1983009808
    %v663 = vunpack.c.0.s8 %v662
    %v664 = vlaneseq
    %v665 = vshrl.u32 %v664, 7
    %v666 = vsub.s32 %v663, %v665
    %v667 = vrot.slane %v645, %v666
    %v669 = vunpack.c.l.s4 1983009808
    %v670 = vunpack.c.0.s8 %v669
    %v671 = vlaneseq
    %v672 = vshrl.u32 %v671, 7
    %v673 = vsub.s32 %v670, %v672
    %v674 = vrot.slane %v646, %v673
    %v675 = vcombine.low %v653, %v667
    %v676 = vcombine.high %v653, %v667
    %v677 = vcombine.low %v660, %v674
    %v678 = vcombine.high %v660, %v674
    %v679 = vcombine.low %v112, %v114
    %v680 = vcombine.low %v116, %v118
    %v682 = vunpack.c.l.s4 1983009808
    %v683 = vunpack.c.0.s8 %v682
    %v684 = vlaneseq
    %v685 = vshrl.u32 %v684, 7
    %v686 = vsub.s32 %v683, %v685
    %v687 = vrot.slane %v679, %v686
    %v689 = vunpack.c.l.s4 1983009808
    %v690 = vunpack.c.0.s8 %v689
    %v691 = vlaneseq
    %v692 = vshrl.u32 %v691, 7
    %v693 = vsub.s32 %v690, %v692
    %v694 = vrot.slane %v680, %v693
    %v695 = vcombine.low %v687, %v694
    %v696 = vcombine.high %v687, %v694
    %v697 = vcombine.low %v119, %v121
    %v698 = vcombine.high %v119, %v121
    %v699 = vcombine.low %v123, %v125
    %v700 = vcombine.high %v123, %v125
    %v702 = vunpack.c.l.s4 1983009808
    %v703 = vunpack.c.0.s8 %v702
    %v704 = vlaneseq
    %v705 = vshrl.u32 %v704, 7
    %v706 = vsub.s32 %v703, %v705
    %v707 = vrot.slane %v697, %v706
    %v709 = vunpack.c.l.s4 1983009808
    %v710 = vunpack.c.0.s8 %v709
    %v711 = vlaneseq
    %v712 = vshrl.u32 %v711, 7
    %v713 = vsub.s32 %v710, %v712
    %v714 = vrot.slane %v698, %v713
    %v716 = vunpack.c.l.s4 1983009808
    %v717 = vunpack.c.0.s8 %v716
    %v718 = vlaneseq
    %v719 = vshrl.u32 %v718, 7
    %v720 = vsub.s32 %v717, %v719
    %v721 = vrot.slane %v699, %v720
    %v723 = vunpack.c.l.s4 1983009808
    %v724 = vunpack.c.0.s8 %v723
    %v725 = vlaneseq
    %v726 = vshrl.u32 %v725, 7
    %v727 = vsub.s32 %v724, %v726
    %v728 = vrot.slane %v700, %v727
    %v729 = vcombine.low %v707, %v721
    %v730 = vcombine.high %v707, %v721
    %v731 = vcombine.low %v714, %v728
    %v732 = vcombine.high %v714, %v728
    %v733 = vcombine.low %v120, %v122
    %v734 = vcombine.low %v124, %v126
    %v736 = vunpack.c.l.s4 1983009808
    %v737 = vunpack.c.0.s8 %v736
    %v738 = vlaneseq
    %v739 = vshrl.u32 %v738, 7
    %v740 = vsub.s32 %v737, %v739
    %v741 = vrot.slane %v733, %v740
    %v743 = vunpack.c.l.s4 1983009808
    %v744 = vunpack.c.0.s8 %v743
    %v745 = vlaneseq
    %v746 = vshrl.u32 %v745, 7
    %v747 = vsub.s32 %v744, %v746
    %v748 = vrot.slane %v734, %v747
    %v749 = vcombine.low %v741, %v748
    %v750 = vcombine.high %v741, %v748
    %v751 = vcombine.low %v127, %v129
    %v752 = vcombine.high %v127, %v129
    %v753 = vcombine.low %v131, %v133
    %v754 = vcombine.high %v131, %v133
    %v756 = vunpack.c.l.s4 1983009808
    %v757 = vunpack.c.0.s8 %v756
    %v758 = vlaneseq
    %v759 = vshrl.u32 %v758, 7
    %v760 = vsub.s32 %v757, %v759
    %v761 = vrot.slane %v751, %v760
    %v763 = vunpack.c.l.s4 1983009808
    %v764 = vunpack.c.0.s8 %v763
    %v765 = vlaneseq
    %v766 = vshrl.u32 %v765, 7
    %v767 = vsub.s32 %v764, %v766
    %v768 = vrot.slane %v752, %v767
    %v770 = vunpack.c.l.s4 1983009808
    %v771 = vunpack.c.0.s8 %v770
    %v772 = vlaneseq
    %v773 = vshrl.u32 %v772, 7
    %v774 = vsub.s32 %v771, %v773
    %v775 = vrot.slane %v753, %v774
    %v777 = vunpack.c.l.s4 1983009808
    %v778 = vunpack.c.0.s8 %v777
    %v779 = vlaneseq
    %v780 = vshrl.u32 %v779, 7
    %v781 = vsub.s32 %v778, %v780
    %v782 = vrot.slane %v754, %v781
    %v783 = vcombine.low %v761, %v775
    %v784 = vcombine.high %v761, %v775
    %v785 = vcombine.low %v768, %v782
    %v786 = vcombine.high %v768, %v782
    %v787 = vcombine.low %v128, %v130
    %v788 = vcombine.low %v132, %v134
    %v790 = vunpack.c.l.s4 1983009808
    %v791 = vunpack.c.0.s8 %v790
    %v792 = vlaneseq
    %v793 = vshrl.u32 %v792, 7
    %v794 = vsub.s32 %v791, %v793
    %v795 = vrot.slane %v787, %v794
    %v797 = vunpack.c.l.s4 1983009808
    %v798 = vunpack.c.0.s8 %v797
    %v799 = vlaneseq
    %v800 = vshrl.u32 %v799, 7
    %v801 = vsub.s32 %v798, %v800
    %v802 = vrot.slane %v788, %v801
    %v803 = vcombine.low %v795, %v802
    %v804 = vcombine.high %v795, %v802
    %v805 = vcombine.low %v135, %v137
    %v806 = vcombine.high %v135, %v137
    %v807 = vcombine.low %v139, %v141
    %v808 = vcombine.high %v139, %v141
    %v810 = vunpack.c.l.s4 1983009808
    %v811 = vunpack.c.0.s8 %v810
    %v812 = vlaneseq
    %v813 = vshrl.u32 %v812, 7
    %v814 = vsub.s32 %v811, %v813
    %v815 = vrot.slane %v805, %v814
    %v817 = vunpack.c.l.s4 1983009808
    %v818 = vunpack.c.0.s8 %v817
    %v819 = vlaneseq
    %v820 = vshrl.u32 %v819, 7
    %v821 = vsub.s32 %v818, %v820
    %v822 = vrot.slane %v806, %v821
    %v824 = vunpack.c.l.s4 1983009808
    %v825 = vunpack.c.0.s8 %v824
    %v826 = vlaneseq
    %v827 = vshrl.u32 %v826, 7
    %v828 = vsub.s32 %v825, %v827
    %v829 = vrot.slane %v807, %v828
    %v831 = vunpack.c.l.s4 1983009808
    %v832 = vunpack.c.0.s8 %v831
    %v833 = vlaneseq
    %v834 = vshrl.u32 %v833, 7
    %v835 = vsub.s32 %v832, %v834
    %v836 = vrot.slane %v808, %v835
    %v837 = vcombine.low %v815, %v829
    %v838 = vcombine.high %v815, %v829
    %v839 = vcombine.low %v822, %v836
    %v840 = vcombine.high %v822, %v836
    %v841 = vcombine.low %v136, %v138
    %v842 = vcombine.low %v140, %v142
    %v844 = vunpack.c.l.s4 1983009808
    %v845 = vunpack.c.0.s8 %v844
    %v846 = vlaneseq
    %v847 = vshrl.u32 %v846, 7
    %v848 = vsub.s32 %v845, %v847
    %v849 = vrot.slane %v841, %v848
    %v851 = vunpack.c.l.s4 1983009808
    %v852 = vunpack.c.0.s8 %v851
    %v853 = vlaneseq
    %v854 = vshrl.u32 %v853, 7
    %v855 = vsub.s32 %v852, %v854
    %v856 = vrot.slane %v842, %v855
    %v857 = vcombine.low %v849, %v856
    %v858 = vcombine.high %v849, %v856
    %v859 = vcombine.low %v143, %v145
    %v860 = vcombine.high %v143, %v145
    %v861 = vcombine.low %v147, %v149
    %v862 = vcombine.high %v147, %v149
    %v864 = vunpack.c.l.s4 1983009808
    %v865 = vunpack.c.0.s8 %v864
    %v866 = vlaneseq
    %v867 = vshrl.u32 %v866, 7
    %v868 = vsub.s32 %v865, %v867
    %v869 = vrot.slane %v859, %v868
    %v871 = vunpack.c.l.s4 1983009808
    %v872 = vunpack.c.0.s8 %v871
    %v873 = vlaneseq
    %v874 = vshrl.u32 %v873, 7
    %v875 = vsub.s32 %v872, %v874
    %v876 = vrot.slane %v860, %v875
    %v878 = vunpack.c.l.s4 1983009808
    %v879 = vunpack.c.0.s8 %v878
    %v880 = vlaneseq
    %v881 = vshrl.u32 %v880, 7
    %v882 = vsub.s32 %v879, %v881
    %v883 = vrot.slane %v861, %v882
    %v885 = vunpack.c.l.s4 1983009808
    %v886 = vunpack.c.0.s8 %v885
    %v887 = vlaneseq
    %v888 = vshrl.u32 %v887, 7
    %v889 = vsub.s32 %v886, %v888
    %v890 = vrot.slane %v862, %v889
    %v891 = vcombine.low %v869, %v883
    %v892 = vcombine.high %v869, %v883
    %v893 = vcombine.low %v876, %v890
    %v894 = vcombine.high %v876, %v890
    %v895 = vcombine.low %v144, %v146
    %v896 = vcombine.low %v148, %v150
    %v898 = vunpack.c.l.s4 1983009808
    %v899 = vunpack.c.0.s8 %v898
    %v900 = vlaneseq
    %v901 = vshrl.u32 %v900, 7
    %v902 = vsub.s32 %v899, %v901
    %v903 = vrot.slane %v895, %v902
    %v905 = vunpack.c.l.s4 1983009808
    %v906 = vunpack.c.0.s8 %v905
    %v907 = vlaneseq
    %v908 = vshrl.u32 %v907, 7
    %v909 = vsub.s32 %v906, %v908
    %v910 = vrot.slane %v896, %v909
    %v911 = vcombine.low %v903, %v910
    %v912 = vcombine.high %v903, %v910
    %v913 = vcombine.low %v151, %v153
    %v914 = vcombine.high %v151, %v153
    %v915 = vcombine.low %v155, %v157
    %v916 = vcombine.high %v155, %v157
    %v918 = vunpack.c.l.s4 1983009808
    %v919 = vunpack.c.0.s8 %v918
    %v920 = vlaneseq
    %v921 = vshrl.u32 %v920, 7
    %v922 = vsub.s32 %v919, %v921
    %v923 = vrot.slane %v913, %v922
    %v925 = vunpack.c.l.s4 1983009808
    %v926 = vunpack.c.0.s8 %v925
    %v927 = vlaneseq
    %v928 = vshrl.u32 %v927, 7
    %v929 = vsub.s32 %v926, %v928
    %v930 = vrot.slane %v914, %v929
    %v932 = vunpack.c.l.s4 1983009808
    %v933 = vunpack.c.0.s8 %v932
    %v934 = vlaneseq
    %v935 = vshrl.u32 %v934, 7
    %v936 = vsub.s32 %v933, %v935
    %v937 = vrot.slane %v915, %v936
    %v939 = vunpack.c.l.s4 1983009808
    %v940 = vunpack.c.0.s8 %v939
    %v941 = vlaneseq
    %v942 = vshrl.u32 %v941, 7
    %v943 = vsub.s32 %v940, %v942
    %v944 = vrot.slane %v916, %v943
    %v945 = vcombine.low %v923, %v937
    %v946 = vcombine.high %v923, %v937
    %v947 = vcombine.low %v930, %v944
    %v948 = vcombine.high %v930, %v944
    %v949 = vcombine.low %v152, %v154
    %v950 = vcombine.low %v156, %v158
    %v952 = vunpack.c.l.s4 1983009808
    %v953 = vunpack.c.0.s8 %v952
    %v954 = vlaneseq
    %v955 = vshrl.u32 %v954, 7
    %v956 = vsub.s32 %v953, %v955
    %v957 = vrot.slane %v949, %v956
    %v959 = vunpack.c.l.s4 1983009808
    %v960 = vunpack.c.0.s8 %v959
    %v961 = vlaneseq
    %v962 = vshrl.u32 %v961, 7
    %v963 = vsub.s32 %v960, %v962
    %v964 = vrot.slane %v950, %v963
    %v965 = vcombine.low %v957, %v964
    %v966 = vcombine.high %v957, %v964
    %v967 = vcombine.low %v159, %v161
    %v968 = vcombine.high %v159, %v161
    %v969 = vcombine.low %v163, %v165
    %v970 = vcombine.high %v163, %v165
    %v972 = vunpack.c.l.s4 1983009808
    %v973 = vunpack.c.0.s8 %v972
    %v974 = vlaneseq
    %v975 = vshrl.u32 %v974, 7
    %v976 = vsub.s32 %v973, %v975
    %v977 = vrot.slane %v967, %v976
    %v979 = vunpack.c.l.s4 1983009808
    %v980 = vunpack.c.0.s8 %v979
    %v981 = vlaneseq
    %v982 = vshrl.u32 %v981, 7
    %v983 = vsub.s32 %v980, %v982
    %v984 = vrot.slane %v968, %v983
    %v986 = vunpack.c.l.s4 1983009808
    %v987 = vunpack.c.0.s8 %v986
    %v988 = vlaneseq
    %v989 = vshrl.u32 %v988, 7
    %v990 = vsub.s32 %v987, %v989
    %v991 = vrot.slane %v969, %v990
    %v993 = vunpack.c.l.s4 1983009808
    %v994 = vunpack.c.0.s8 %v993
    %v995 = vlaneseq
    %v996 = vshrl.u32 %v995, 7
    %v997 = vsub.s32 %v994, %v996
    %v998 = vrot.slane %v970, %v997
    %v999 = vcombine.low %v977, %v991
    %v1000 = vcombine.high %v977, %v991
    %v1001 = vcombine.low %v984, %v998
    %v1002 = vcombine.high %v984, %v998
    %v1003 = vcombine.low %v160, %v162
    %v1004 = vcombine.low %v164, %v166
    %v1006 = vunpack.c.l.s4 1983009808
    %v1007 = vunpack.c.0.s8 %v1006
    %v1008 = vlaneseq
    %v1009 = vshrl.u32 %v1008, 7
    %v1010 = vsub.s32 %v1007, %v1009
    %v1011 = vrot.slane %v1003, %v1010
    %v1013 = vunpack.c.l.s4 1983009808
    %v1014 = vunpack.c.0.s8 %v1013
    %v1015 = vlaneseq
    %v1016 = vshrl.u32 %v1015, 7
    %v1017 = vsub.s32 %v1014, %v1016
    %v1018 = vrot.slane %v1004, %v1017
    %v1019 = vcombine.low %v1011, %v1018
    %v1020 = vcombine.high %v1011, %v1018
    %v1021 = vcombine.low %v167, %v169
    %v1022 = vcombine.high %v167, %v169
    %v1023 = vcombine.low %v171, %v173
    %v1024 = vcombine.high %v171, %v173
    %v1026 = vunpack.c.l.s4 1983009808
    %v1027 = vunpack.c.0.s8 %v1026
    %v1028 = vlaneseq
    %v1029 = vshrl.u32 %v1028, 7
    %v1030 = vsub.s32 %v1027, %v1029
    %v1031 = vrot.slane %v1021, %v1030
    %v1033 = vunpack.c.l.s4 1983009808
    %v1034 = vunpack.c.0.s8 %v1033
    %v1035 = vlaneseq
    %v1036 = vshrl.u32 %v1035, 7
    %v1037 = vsub.s32 %v1034, %v1036
    %v1038 = vrot.slane %v1022, %v1037
    %v1040 = vunpack.c.l.s4 1983009808
    %v1041 = vunpack.c.0.s8 %v1040
    %v1042 = vlaneseq
    %v1043 = vshrl.u32 %v1042, 7
    %v1044 = vsub.s32 %v1041, %v1043
    %v1045 = vrot.slane %v1023, %v1044
    %v1047 = vunpack.c.l.s4 1983009808
    %v1048 = vunpack.c.0.s8 %v1047
    %v1049 = vlaneseq
    %v1050 = vshrl.u32 %v1049, 7
    %v1051 = vsub.s32 %v1048, %v1050
    %v1052 = vrot.slane %v1024, %v1051
    %v1053 = vcombine.low %v1031, %v1045
    %v1054 = vcombine.high %v1031, %v1045
    %v1055 = vcombine.low %v1038, %v1052
    %v1056 = vcombine.high %v1038, %v1052
    %v1057 = vcombine.low %v168, %v170
    %v1058 = vcombine.low %v172, %v174
    %v1060 = vunpack.c.l.s4 1983009808
    %v1061 = vunpack.c.0.s8 %v1060
    %v1062 = vlaneseq
    %v1063 = vshrl.u32 %v1062, 7
    %v1064 = vsub.s32 %v1061, %v1063
    %v1065 = vrot.slane %v1057, %v1064
    %v1067 = vunpack.c.l.s4 1983009808
    %v1068 = vunpack.c.0.s8 %v1067
    %v1069 = vlaneseq
    %v1070 = vshrl.u32 %v1069, 7
    %v1071 = vsub.s32 %v1068, %v1070
    %v1072 = vrot.slane %v1058, %v1071
    %v1073 = vcombine.low %v1065, %v1072
    %v1074 = vcombine.high %v1065, %v1072
    %v1075 = vcombine.low %v175, %v177
    %v1076 = vcombine.high %v175, %v177
    %v1077 = vcombine.low %v179, %v181
    %v1078 = vcombine.high %v179, %v181
    %v1080 = vunpack.c.l.s4 1983009808
    %v1081 = vunpack.c.0.s8 %v1080
    %v1082 = vlaneseq
    %v1083 = vshrl.u32 %v1082, 7
    %v1084 = vsub.s32 %v1081, %v1083
    %v1085 = vrot.slane %v1075, %v1084
    %v1087 = vunpack.c.l.s4 1983009808
    %v1088 = vunpack.c.0.s8 %v1087
    %v1089 = vlaneseq
    %v1090 = vshrl.u32 %v1089, 7
    %v1091 = vsub.s32 %v1088, %v1090
    %v1092 = vrot.slane %v1076, %v1091
    %v1094 = vunpack.c.l.s4 1983009808
    %v1095 = vunpack.c.0.s8 %v1094
    %v1096 = vlaneseq
    %v1097 = vshrl.u32 %v1096, 7
    %v1098 = vsub.s32 %v1095, %v1097
    %v1099 = vrot.slane %v1077, %v1098
    %v1101 = vunpack.c.l.s4 1983009808
    %v1102 = vunpack.c.0.s8 %v1101
    %v1103 = vlaneseq
    %v1104 = vshrl.u32 %v1103, 7
    %v1105 = vsub.s32 %v1102, %v1104
    %v1106 = vrot.slane %v1078, %v1105
    %v1107 = vcombine.low %v1085, %v1099
    %v1108 = vcombine.high %v1085, %v1099
    %v1109 = vcombine.low %v1092, %v1106
    %v1110 = vcombine.high %v1092, %v1106
    %v1111 = vcombine.low %v176, %v178
    %v1112 = vcombine.low %v180, %v182
    %v1114 = vunpack.c.l.s4 1983009808
    %v1115 = vunpack.c.0.s8 %v1114
    %v1116 = vlaneseq
    %v1117 = vshrl.u32 %v1116, 7
    %v1118 = vsub.s32 %v1115, %v1117
    %v1119 = vrot.slane %v1111, %v1118
    %v1121 = vunpack.c.l.s4 1983009808
    %v1122 = vunpack.c.0.s8 %v1121
    %v1123 = vlaneseq
    %v1124 = vshrl.u32 %v1123, 7
    %v1125 = vsub.s32 %v1122, %v1124
    %v1126 = vrot.slane %v1112, %v1125
    %v1127 = vcombine.low %v1119, %v1126
    %v1128 = vcombine.high %v1119, %v1126
    %v1129 = vcombine.low %v183, %v185
    %v1130 = vcombine.high %v183, %v185
    %v1131 = vcombine.low %v187, %v189
    %v1132 = vcombine.high %v187, %v189
    %v1134 = vunpack.c.l.s4 1983009808
    %v1135 = vunpack.c.0.s8 %v1134
    %v1136 = vlaneseq
    %v1137 = vshrl.u32 %v1136, 7
    %v1138 = vsub.s32 %v1135, %v1137
    %v1139 = vrot.slane %v1129, %v1138
    %v1141 = vunpack.c.l.s4 1983009808
    %v1142 = vunpack.c.0.s8 %v1141
    %v1143 = vlaneseq
    %v1144 = vshrl.u32 %v1143, 7
    %v1145 = vsub.s32 %v1142, %v1144
    %v1146 = vrot.slane %v1130, %v1145
    %v1148 = vunpack.c.l.s4 1983009808
    %v1149 = vunpack.c.0.s8 %v1148
    %v1150 = vlaneseq
    %v1151 = vshrl.u32 %v1150, 7
    %v1152 = vsub.s32 %v1149, %v1151
    %v1153 = vrot.slane %v1131, %v1152
    %v1155 = vunpack.c.l.s4 1983009808
    %v1156 = vunpack.c.0.s8 %v1155
    %v1157 = vlaneseq
    %v1158 = vshrl.u32 %v1157, 7
    %v1159 = vsub.s32 %v1156, %v1158
    %v1160 = vrot.slane %v1132, %v1159
    %v1161 = vcombine.low %v1139, %v1153
    %v1162 = vcombine.high %v1139, %v1153
    %v1163 = vcombine.low %v1146, %v1160
    %v1164 = vcombine.high %v1146, %v1160
    %v1165 = vcombine.low %v184, %v186
    %v1166 = vcombine.low %v188, %v190
    %v1168 = vunpack.c.l.s4 1983009808
    %v1169 = vunpack.c.0.s8 %v1168
    %v1170 = vlaneseq
    %v1171 = vshrl.u32 %v1170, 7
    %v1172 = vsub.s32 %v1169, %v1171
    %v1173 = vrot.slane %v1165, %v1172
    %v1175 = vunpack.c.l.s4 1983009808
    %v1176 = vunpack.c.0.s8 %v1175
    %v1177 = vlaneseq
    %v1178 = vshrl.u32 %v1177, 7
    %v1179 = vsub.s32 %v1176, %v1178
    %v1180 = vrot.slane %v1166, %v1179
    %v1181 = vcombine.low %v1173, %v1180
    %v1182 = vcombine.high %v1173, %v1180
    %v1279 = vpack.c.bf16 %v405, %v351
    %v1280 = vpack.c.bf16 %v406, %v352
    %v1281 = vpack.c.bf16 %v407, %v353
    %v1282 = vpack.c.bf16 %v408, %v354
    %v1283 = vpack.c.bf16 %v425, %v371
    %v1284 = vpack.c.bf16 %v426, %v372
    %v1285 = vpack.c.bf16 %v513, %v459
    %v1286 = vpack.c.bf16 %v514, %v460
    %v1287 = vpack.c.bf16 %v515, %v461
    %v1288 = vpack.c.bf16 %v516, %v462
    %v1289 = vpack.c.bf16 %v533, %v479
    %v1290 = vpack.c.bf16 %v534, %v480
    %v1291 = vpack.c.bf16 %v621, %v567
    %v1292 = vpack.c.bf16 %v622, %v568
    %v1293 = vpack.c.bf16 %v623, %v569
    %v1294 = vpack.c.bf16 %v624, %v570
    %v1295 = vpack.c.bf16 %v641, %v587
    %v1296 = vpack.c.bf16 %v642, %v588
    %v1297 = vpack.c.bf16 %v729, %v675
    %v1298 = vpack.c.bf16 %v730, %v676
    %v1299 = vpack.c.bf16 %v731, %v677
    %v1300 = vpack.c.bf16 %v732, %v678
    %v1301 = vpack.c.bf16 %v749, %v695
    %v1302 = vpack.c.bf16 %v750, %v696
    %v1303 = vpack.c.bf16 %v837, %v783
    %v1304 = vpack.c.bf16 %v838, %v784
    %v1305 = vpack.c.bf16 %v839, %v785
    %v1306 = vpack.c.bf16 %v840, %v786
    %v1307 = vpack.c.bf16 %v857, %v803
    %v1308 = vpack.c.bf16 %v858, %v804
    %v1309 = vpack.c.bf16 %v945, %v891
    %v1310 = vpack.c.bf16 %v946, %v892
    %v1311 = vpack.c.bf16 %v947, %v893
    %v1312 = vpack.c.bf16 %v948, %v894
    %v1313 = vpack.c.bf16 %v965, %v911
    %v1314 = vpack.c.bf16 %v966, %v912
    %v1315 = vpack.c.bf16 %v1053, %v999
    %v1316 = vpack.c.bf16 %v1054, %v1000
    %v1317 = vpack.c.bf16 %v1055, %v1001
    %v1318 = vpack.c.bf16 %v1056, %v1002
    %v1319 = vpack.c.bf16 %v1073, %v1019
    %v1320 = vpack.c.bf16 %v1074, %v1020
    %v1321 = vpack.c.bf16 %v1161, %v1107
    %v1322 = vpack.c.bf16 %v1162, %v1108
    %v1323 = vpack.c.bf16 %v1163, %v1109
    %v1324 = vpack.c.bf16 %v1164, %v1110
    %v1325 = vpack.c.bf16 %v1181, %v1127
    %v1326 = vpack.c.bf16 %v1182, %v1128
    %v1327 = vld [vmem:[#allocation5] sm:$0xf]
    %v1328 = vld [vmem:[#allocation5 + $0x4] sm:$0xf]
    %v1329 = vld [vmem:[#allocation5 + $0x8] sm:$0xf]
    %v1330 = vld [vmem:[#allocation5 + $0xc] sm:$0xf]
    %v1331 = vld [vmem:[#allocation5 + $0x10] sm:$0xf]
    %v1332 = vld [vmem:[#allocation5 + $0x14] sm:$0xf]
    %v1333 = vld [vmem:[#allocation5 + $0x18] sm:$0xf]
    %v1334 = vld [vmem:[#allocation5 + $0x1c] sm:$0xf]
    %v1335 = vld [vmem:[#allocation5 + $0x20] sm:$0xf]
    %v1336 = vld [vmem:[#allocation5 + $0x24] sm:$0xf]
    %v1337 = vld [vmem:[#allocation5 + $0x28] sm:$0xf]
    %v1338 = vld [vmem:[#allocation5 + $0x2c] sm:$0xf]
    %v1339 = vld [vmem:[#allocation5 + $0x30] sm:$0xf]
    %v1340 = vld [vmem:[#allocation5 + $0x34] sm:$0xf]
    %v1341 = vld [vmem:[#allocation5 + $0x38] sm:$0xf]
    %v1342 = vld [vmem:[#allocation5 + $0x3c] sm:$0xf]
    %v1343 = vld [vmem:[#allocation5 + $0x40] sm:$0xf]
    %v1344 = vld [vmem:[#allocation5 + $0x44] sm:$0xf]
    %v1345 = vld [vmem:[#allocation5 + $0x48] sm:$0xf]
    %v1346 = vld [vmem:[#allocation5 + $0x4c] sm:$0xf]
    %v1347 = vld [vmem:[#allocation5 + $0x50] sm:$0xf]
    %v1348 = vld [vmem:[#allocation5 + $0x54] sm:$0xf]
    %v1349 = vld [vmem:[#allocation5 + $0x58] sm:$0xf]
    %v1350 = vld [vmem:[#allocation5 + $0x5c] sm:$0xf]
    %v1351 = vld [vmem:[#allocation5 + $0x60] sm:$0xf]
    %v1352 = vld [vmem:[#allocation5 + $0x64] sm:$0xf]
    %v1353 = vld [vmem:[#allocation5 + $0x68] sm:$0xf]
    %v1354 = vld [vmem:[#allocation5 + $0x6c] sm:$0xf]
    %v1355 = vld [vmem:[#allocation5 + $0x70] sm:$0xf]
    %v1356 = vld [vmem:[#allocation5 + $0x74] sm:$0xf]
    %v1357 = vld [vmem:[#allocation5 + $0x78] sm:$0xf]
    %v1358 = vld [vmem:[#allocation5 + $0x7c] sm:$0xf]
    %v1359 = vld [vmem:[#allocation5 + $0x80] sm:$0xf]
    %v1360 = vld [vmem:[#allocation5 + $0x84] sm:$0xf]
    %v1361 = vld [vmem:[#allocation5 + $0x88] sm:$0xf]
    %v1362 = vld [vmem:[#allocation5 + $0x8c] sm:$0xf]
    %v1363 = vld [vmem:[#allocation5 + $0x90] sm:$0xf]
    %v1364 = vld [vmem:[#allocation5 + $0x94] sm:$0xf]
    %v1365 = vld [vmem:[#allocation5 + $0x98] sm:$0xf]
    %v1366 = vld [vmem:[#allocation5 + $0x9c] sm:$0xf]
    %v1367 = vld [vmem:[#allocation5 + $0xa0] sm:$0xf]
    %v1368 = vld [vmem:[#allocation5 + $0xa4] sm:$0xf]
    %v1369 = vld [vmem:[#allocation5 + $0xa8] sm:$0xf]
    %v1370 = vld [vmem:[#allocation5 + $0xac] sm:$0xf]
    %v1371 = vld [vmem:[#allocation5 + $0xb0] sm:$0xf]
    %v1372 = vld [vmem:[#allocation5 + $0xb4] sm:$0xf]
    %v1373 = vld [vmem:[#allocation5 + $0xb8] sm:$0xf]
    %v1374 = vld [vmem:[#allocation5 + $0xbc] sm:$0xf]
    %v1375 = vld [vmem:[#allocation5 + $0xc0] sm:$0xf]
    %v1376 = vld [vmem:[#allocation5 + $0xc4] sm:$0xf]
    %v1377 = vld [vmem:[#allocation5 + $0xc8] sm:$0xf]
    %v1378 = vld [vmem:[#allocation5 + $0xcc] sm:$0xf]
    %v1379 = vld [vmem:[#allocation5 + $0xd0] sm:$0xf]
    %v1380 = vld [vmem:[#allocation5 + $0xd4] sm:$0xf]
    %v1381 = vld [vmem:[#allocation5 + $0xd8] sm:$0xf]
    %v1382 = vld [vmem:[#allocation5 + $0xdc] sm:$0xf]
    %v1383 = vld [vmem:[#allocation5 + $0xe0] sm:$0xf]
    %v1384 = vld [vmem:[#allocation5 + $0xe4] sm:$0xf]
    %v1385 = vld [vmem:[#allocation5 + $0xe8] sm:$0xf]
    %v1386 = vld [vmem:[#allocation5 + $0xec] sm:$0xf]
    %v1387 = vld [vmem:[#allocation5 + $0xf0] sm:$0xf]
    %v1388 = vld [vmem:[#allocation5 + $0xf4] sm:$0xf]
    %v1389 = vld [vmem:[#allocation5 + $0xf8] sm:$0xf]
    %v1390 = vld [vmem:[#allocation5 + $0xfc] sm:$0xf]
    %v1391 = vld [vmem:[#allocation5 + $0x100] sm:$0xf]
    %v1392 = vld [vmem:[#allocation5 + $0x104] sm:$0xf]
    %v1393 = vld [vmem:[#allocation5 + $0x108] sm:$0xf]
    %v1394 = vld [vmem:[#allocation5 + $0x10c] sm:$0xf]
    %v1395 = vld [vmem:[#allocation5 + $0x110] sm:$0xf]
    %v1396 = vld [vmem:[#allocation5 + $0x114] sm:$0xf]
    %v1397 = vld [vmem:[#allocation5 + $0x118] sm:$0xf]
    %v1398 = vld [vmem:[#allocation5 + $0x11c] sm:$0xf]
    %v1399 = vld [vmem:[#allocation5 + $0x120] sm:$0xf]
    %v1400 = vld [vmem:[#allocation5 + $0x124] sm:$0xf]
    %v1401 = vld [vmem:[#allocation5 + $0x128] sm:$0xf]
    %v1402 = vld [vmem:[#allocation5 + $0x12c] sm:$0xf]
    %v1403 = vld [vmem:[#allocation5 + $0x130] sm:$0xf]
    %v1404 = vld [vmem:[#allocation5 + $0x134] sm:$0xf]
    %v1405 = vld [vmem:[#allocation5 + $0x138] sm:$0xf]
    %v1406 = vld [vmem:[#allocation5 + $0x13c] sm:$0xf]
    %v1407 = vld [vmem:[#allocation5 + $0x140] sm:$0xf]
    %v1408 = vld [vmem:[#allocation5 + $0x144] sm:$0xf]
    %v1409 = vld [vmem:[#allocation5 + $0x148] sm:$0xf]
    %v1410 = vld [vmem:[#allocation5 + $0x14c] sm:$0xf]
    %v1411 = vld [vmem:[#allocation5 + $0x150] sm:$0xf]
    %v1412 = vld [vmem:[#allocation5 + $0x154] sm:$0xf]
    %v1413 = vld [vmem:[#allocation5 + $0x158] sm:$0xf]
    %v1414 = vld [vmem:[#allocation5 + $0x15c] sm:$0xf]
    %v1415 = vld [vmem:[#allocation5 + $0x160] sm:$0xf]
    %v1416 = vld [vmem:[#allocation5 + $0x164] sm:$0xf]
    %v1417 = vld [vmem:[#allocation5 + $0x168] sm:$0xf]
    %v1418 = vld [vmem:[#allocation5 + $0x16c] sm:$0xf]
    %v1419 = vld [vmem:[#allocation5 + $0x170] sm:$0xf]
    %v1420 = vld [vmem:[#allocation5 + $0x174] sm:$0xf]
    %v1421 = vld [vmem:[#allocation5 + $0x178] sm:$0xf]
    %v1422 = vld [vmem:[#allocation5 + $0x17c] sm:$0xf]
    %v1423 = vld [vmem:[%s2] sm:$0x1]
    %v1425 = vlaneseq
    %v1426 = vshrl.u32 %v1425, 7
    %v1427 = vsub.s32 0, %v1426
    %v1428 = vrot.slane %v1423, %v1427
    %v1526 = vunpack.c.l.b16 %v1327
    %v1527 = vunpack.c.l.b16 %v1328
    %v1528 = vunpack.c.l.b16 %v1329
    %v1529 = vunpack.c.l.b16 %v1330
    %v1530 = vunpack.c.l.b16 %v1331
    %v1531 = vunpack.c.l.b16 %v1332
    %v1532 = vunpack.c.l.b16 %v1333
    %v1533 = vunpack.c.l.b16 %v1334
    %v1534 = vunpack.c.l.b16 %v1335
    %v1535 = vunpack.c.l.b16 %v1336
    %v1536 = vunpack.c.l.b16 %v1337
    %v1537 = vunpack.c.l.b16 %v1338
    %v1538 = vunpack.c.l.b16 %v1339
    %v1539 = vunpack.c.l.b16 %v1340
    %v1540 = vunpack.c.l.b16 %v1341
    %v1541 = vunpack.c.l.b16 %v1342
    %v1542 = vunpack.c.l.b16 %v1343
    %v1543 = vunpack.c.l.b16 %v1344
    %v1544 = vunpack.c.l.b16 %v1345
    %v1545 = vunpack.c.l.b16 %v1346
    %v1546 = vunpack.c.l.b16 %v1347
    %v1547 = vunpack.c.l.b16 %v1348
    %v1548 = vunpack.c.l.b16 %v1349
    %v1549 = vunpack.c.l.b16 %v1350
    %v1550 = vunpack.c.l.b16 %v1351
    %v1551 = vunpack.c.l.b16 %v1352
    %v1552 = vunpack.c.l.b16 %v1353
    %v1553 = vunpack.c.l.b16 %v1354
    %v1554 = vunpack.c.l.b16 %v1355
    %v1555 = vunpack.c.l.b16 %v1356
    %v1556 = vunpack.c.l.b16 %v1357
    %v1557 = vunpack.c.l.b16 %v1358
    %v1558 = vunpack.c.l.b16 %v1359
    %v1559 = vunpack.c.l.b16 %v1360
    %v1560 = vunpack.c.l.b16 %v1361
    %v1561 = vunpack.c.l.b16 %v1362
    %v1562 = vunpack.c.l.b16 %v1363
    %v1563 = vunpack.c.l.b16 %v1364
    %v1564 = vunpack.c.l.b16 %v1365
    %v1565 = vunpack.c.l.b16 %v1366
    %v1566 = vunpack.c.l.b16 %v1367
    %v1567 = vunpack.c.l.b16 %v1368
    %v1568 = vunpack.c.l.b16 %v1369
    %v1569 = vunpack.c.l.b16 %v1370
    %v1570 = vunpack.c.l.b16 %v1371
    %v1571 = vunpack.c.l.b16 %v1372
    %v1572 = vunpack.c.l.b16 %v1373
    %v1573 = vunpack.c.l.b16 %v1374
    %v1574 = vunpack.c.l.b16 %v1375
    %v1575 = vunpack.c.l.b16 %v1376
    %v1576 = vunpack.c.l.b16 %v1377
    %v1577 = vunpack.c.l.b16 %v1378
    %v1578 = vunpack.c.l.b16 %v1379
    %v1579 = vunpack.c.l.b16 %v1380
    %v1580 = vunpack.c.l.b16 %v1381
    %v1581 = vunpack.c.l.b16 %v1382
    %v1582 = vunpack.c.l.b16 %v1383
    %v1583 = vunpack.c.l.b16 %v1384
    %v1584 = vunpack.c.l.b16 %v1385
    %v1585 = vunpack.c.l.b16 %v1386
    %v1586 = vunpack.c.l.b16 %v1387
    %v1587 = vunpack.c.l.b16 %v1388
    %v1588 = vunpack.c.l.b16 %v1389
    %v1589 = vunpack.c.l.b16 %v1390
    %v1590 = vunpack.c.l.b16 %v1391
    %v1591 = vunpack.c.l.b16 %v1392
    %v1592 = vunpack.c.l.b16 %v1393
    %v1593 = vunpack.c.l.b16 %v1394
    %v1594 = vunpack.c.l.b16 %v1395
    %v1595 = vunpack.c.l.b16 %v1396
    %v1596 = vunpack.c.l.b16 %v1397
    %v1597 = vunpack.c.l.b16 %v1398
    %v1598 = vunpack.c.l.b16 %v1399
    %v1599 = vunpack.c.l.b16 %v1400
    %v1600 = vunpack.c.l.b16 %v1401
    %v1601 = vunpack.c.l.b16 %v1402
    %v1602 = vunpack.c.l.b16 %v1403
    %v1603 = vunpack.c.l.b16 %v1404
    %v1604 = vunpack.c.l.b16 %v1405
    %v1605 = vunpack.c.l.b16 %v1406
    %v1606 = vunpack.c.l.b16 %v1407
    %v1607 = vunpack.c.l.b16 %v1408
    %v1608 = vunpack.c.l.b16 %v1409
    %v1609 = vunpack.c.l.b16 %v1410
    %v1610 = vunpack.c.l.b16 %v1411
    %v1611 = vunpack.c.l.b16 %v1412
    %v1612 = vunpack.c.l.b16 %v1413
    %v1613 = vunpack.c.l.b16 %v1414
    %v1614 = vunpack.c.l.b16 %v1415
    %v1615 = vunpack.c.l.b16 %v1416
    %v1616 = vunpack.c.l.b16 %v1417
    %v1617 = vunpack.c.l.b16 %v1418
    %v1618 = vunpack.c.l.b16 %v1419
    %v1619 = vunpack.c.l.b16 %v1420
    %v1620 = vunpack.c.l.b16 %v1421
    %v1621 = vunpack.c.l.b16 %v1422
    %v1622 = vpack.c.b16 %v1527, %v1526
    %v1623 = vpack.c.b16 %v1529, %v1528
    %v1624 = vpack.c.b16 %v1531, %v1530
    %v1625 = vpack.c.b16 %v1533, %v1532
    %v1626 = vpack.c.b16 %v1535, %v1534
    %v1627 = vpack.c.b16 %v1537, %v1536
    %v1628 = vpack.c.b16 %v1539, %v1538
    %v1629 = vpack.c.b16 %v1541, %v1540
    %v1630 = vpack.c.b16 %v1543, %v1542
    %v1631 = vpack.c.b16 %v1545, %v1544
    %v1632 = vpack.c.b16 %v1547, %v1546
    %v1633 = vpack.c.b16 %v1549, %v1548
    %v1634 = vpack.c.b16 %v1551, %v1550
    %v1635 = vpack.c.b16 %v1553, %v1552
    %v1636 = vpack.c.b16 %v1555, %v1554
    %v1637 = vpack.c.b16 %v1557, %v1556
    %v1638 = vpack.c.b16 %v1559, %v1558
    %v1639 = vpack.c.b16 %v1561, %v1560
    %v1640 = vpack.c.b16 %v1563, %v1562
    %v1641 = vpack.c.b16 %v1565, %v1564
    %v1642 = vpack.c.b16 %v1567, %v1566
    %v1643 = vpack.c.b16 %v1569, %v1568
    %v1644 = vpack.c.b16 %v1571, %v1570
    %v1645 = vpack.c.b16 %v1573, %v1572
    %v1646 = vpack.c.b16 %v1575, %v1574
    %v1647 = vpack.c.b16 %v1577, %v1576
    %v1648 = vpack.c.b16 %v1579, %v1578
    %v1649 = vpack.c.b16 %v1581, %v1580
    %v1650 = vpack.c.b16 %v1583, %v1582
    %v1651 = vpack.c.b16 %v1585, %v1584
    %v1652 = vpack.c.b16 %v1587, %v1586
    %v1653 = vpack.c.b16 %v1589, %v1588
    %v1654 = vpack.c.b16 %v1591, %v1590
    %v1655 = vpack.c.b16 %v1593, %v1592
    %v1656 = vpack.c.b16 %v1595, %v1594
    %v1657 = vpack.c.b16 %v1597, %v1596
    %v1658 = vpack.c.b16 %v1599, %v1598
    %v1659 = vpack.c.b16 %v1601, %v1600
    %v1660 = vpack.c.b16 %v1603, %v1602
    %v1661 = vpack.c.b16 %v1605, %v1604
    %v1662 = vpack.c.b16 %v1607, %v1606
    %v1663 = vpack.c.b16 %v1609, %v1608
    %v1664 = vpack.c.b16 %v1611, %v1610
    %v1665 = vpack.c.b16 %v1613, %v1612
    %v1666 = vpack.c.b16 %v1615, %v1614
    %v1667 = vpack.c.b16 %v1617, %v1616
    %v1668 = vpack.c.b16 %v1619, %v1618
    %v1669 = vpack.c.b16 %v1621, %v1620
    %1718 = vmatprep.subr.bf16.mxu0 0
    %1719 = vmatpush1.bf16.msra.mxu0 %v1622
    %1720 = vmatprep.subr.bf16.mxu0 0
    %1721 = vmatpush1.bf16.msra.mxu0 %v1623
    %1722 = vmatprep.subr.bf16.mxu0 0
    %1723 = vmatpush1.bf16.msra.mxu0 %v1624
    %1724 = vmatprep.subr.bf16.mxu0 0
    %1725 = vmatpush1.bf16.msra.mxu0 %v1625
    %1726 = vmatprep.subr.bf16.mxu0 0
    %1727 = vmatpush1.bf16.msra.mxu0 %v1626
    %1728 = vmatprep.subr.bf16.mxu0 0
    %1729 = vmatpush1.bf16.msra.mxu0 %v1627
    %1730 = vmatprep.subr.bf16.mxu0 0
    %1731 = vmatpush1.bf16.msra.mxu0 %v1628
    %1732 = vmatprep.subr.bf16.mxu0 0
    %1733 = vmatpush1.bf16.msra.mxu0 %v1629
    %1734 = vmatprep.subr.bf16.mxu0 0
    %1735 = vmatpush1.bf16.msra.mxu0 %v1630
    %1736 = vmatprep.subr.bf16.mxu0 0
    %1737 = vmatpush1.bf16.msra.mxu0 %v1631
    %1738 = vmatprep.subr.bf16.mxu0 0
    %1739 = vmatpush1.bf16.msra.mxu0 %v1632
    %1740 = vmatprep.subr.bf16.mxu0 0
    %1741 = vmatpush1.bf16.msra.mxu0 %v1633
    %1742 = vmatprep.subr.bf16.mxu0 0
    %1743 = vmatpush1.bf16.msra.mxu0 %v1634
    %1744 = vmatprep.subr.bf16.mxu0 0
    %1745 = vmatpush1.bf16.msra.mxu0 %v1635
    %1746 = vmatprep.subr.bf16.mxu0 0
    %1747 = vmatpush1.bf16.msra.mxu0 %v1636
    %1748 = vmatprep.subr.bf16.mxu0 0
    %1749 = vmatpush1.bf16.msra.mxu0 %v1637
    %1750 = vmatprep.mubr.bf16.mxu0 %v1280
    %1751 = vmatmul.mubr.bf16.gmra.mrb[0].mxu0 %v1279
    %v1752 = vpop.f32.mrb[0].mxu0
    %v1753 = vadd.f32 %v1428, %v1752
    %v1754 = vpop.f32.mrb[0].mxu0
    %v1755 = vpop.f32.mrb[0].mxu0
    %v1756 = vadd.f32 %v1428, %v1755
    %v1757 = vpop.f32.mrb[0].mxu0
    %1758 = vmatprep.mubr.bf16.mxu0 %v1286
    %1759 = vmatmul.mubr.bf16.gmra.mrb[0].mxu0 %v1285
    %v1760 = vpop.f32.mrb[0].mxu0
    %v1761 = vadd.f32 %v1428, %v1760
    %v1762 = vpop.f32.mrb[0].mxu0
    %v1763 = vpop.f32.mrb[0].mxu0
    %v1764 = vadd.f32 %v1428, %v1763
    %v1765 = vpop.f32.mrb[0].mxu0
    %1766 = vmatprep.mubr.bf16.mxu0 %v1292
    %1767 = vmatmul.mubr.bf16.gmra.mrb[0].mxu0 %v1291
    %v1768 = vpop.f32.mrb[0].mxu0
    %v1769 = vadd.f32 %v1428, %v1768
    %v1770 = vpop.f32.mrb[0].mxu0
    %v1771 = vpop.f32.mrb[0].mxu0
    %v1772 = vadd.f32 %v1428, %v1771
    %v1773 = vpop.f32.mrb[0].mxu0
    %1774 = vmatprep.mubr.bf16.mxu0 %v1298
    %1775 = vmatmul.mubr.bf16.gmra.mrb[0].mxu0 %v1297
    %v1776 = vpop.f32.mrb[0].mxu0
    %v1777 = vadd.f32 %v1428, %v1776
    %v1778 = vpop.f32.mrb[0].mxu0
    %v1779 = vpop.f32.mrb[0].mxu0
    %v1780 = vadd.f32 %v1428, %v1779
    %v1781 = vpop.f32.mrb[0].mxu0
    %1782 = vmatprep.mubr.bf16.mxu0 %v1304
    %1783 = vmatmul.mubr.bf16.gmra.mrb[0].mxu0 %v1303
    %v1784 = vpop.f32.mrb[0].mxu0
    %v1785 = vadd.f32 %v1428, %v1784
    %v1786 = vpop.f32.mrb[0].mxu0
    %v1787 = vpop.f32.mrb[0].mxu0
    %v1788 = vadd.f32 %v1428, %v1787
    %v1789 = vpop.f32.mrb[0].mxu0
    %1790 = vmatprep.mubr.bf16.mxu0 %v1310
    %1791 = vmatmul.mubr.bf16.gmra.mrb[0].mxu0 %v1309
    %v1792 = vpop.f32.mrb[0].mxu0
    %v1793 = vadd.f32 %v1428, %v1792
    %v1794 = vpop.f32.mrb[0].mxu0
    %v1795 = vpop.f32.mrb[0].mxu0
    %v1796 = vadd.f32 %v1428, %v1795
    %v1797 = vpop.f32.mrb[0].mxu0
    %1798 = vmatprep.mubr.bf16.mxu0 %v1316
    %1799 = vmatmul.mubr.bf16.gmra.mrb[0].mxu0 %v1315
    %v1800 = vpop.f32.mrb[0].mxu0
    %v1801 = vadd.f32 %v1428, %v1800
    %v1802 = vpop.f32.mrb[0].mxu0
    %v1803 = vpop.f32.mrb[0].mxu0
    %v1804 = vadd.f32 %v1428, %v1803
    %v1805 = vpop.f32.mrb[0].mxu0
    %1806 = vmatprep.mubr.bf16.mxu0 %v1322
    %1807 = vmatmul.mubr.bf16.gmra.mrb[0].mxu0 %v1321
    %v1808 = vpop.f32.mrb[0].mxu0
    %v1809 = vadd.f32 %v1428, %v1808
    %v1810 = vpop.f32.mrb[0].mxu0
    %v1811 = vpop.f32.mrb[0].mxu0
    %v1812 = vadd.f32 %v1428, %v1811
    %v1813 = vpop.f32.mrb[0].mxu0
    %1814 = vdwg.mxu0
    %1815 = vmatprep.subr.bf16.mxu0 0
    %1816 = vmatpush1.bf16.msra.mxu0 %v1638
    %1817 = vmatprep.subr.bf16.mxu0 0
    %1818 = vmatpush1.bf16.msra.mxu0 %v1639
    %1819 = vmatprep.subr.bf16.mxu0 0
    %1820 = vmatpush1.bf16.msra.mxu0 %v1640
    %1821 = vmatprep.subr.bf16.mxu0 0
    %1822 = vmatpush1.bf16.msra.mxu0 %v1641
    %1823 = vmatprep.subr.bf16.mxu0 0
    %1824 = vmatpush1.bf16.msra.mxu0 %v1642
    %1825 = vmatprep.subr.bf16.mxu0 0
    %1826 = vmatpush1.bf16.msra.mxu0 %v1643
    %1827 = vmatprep.subr.bf16.mxu0 0
    %1828 = vmatpush1.bf16.msra.mxu0 %v1644
    %1829 = vmatprep.subr.bf16.mxu0 0
    %1830 = vmatpush1.bf16.msra.mxu0 %v1645
    %1831 = vmatprep.subr.bf16.mxu0 0
    %1832 = vmatpush1.bf16.msra.mxu0 %v1646
    %1833 = vmatprep.subr.bf16.mxu0 0
    %1834 = vmatpush1.bf16.msra.mxu0 %v1647
    %1835 = vmatprep.subr.bf16.mxu0 0
    %1836 = vmatpush1.bf16.msra.mxu0 %v1648
    %1837 = vmatprep.subr.bf16.mxu0 0
    %1838 = vmatpush1.bf16.msra.mxu0 %v1649
    %1839 = vmatprep.subr.bf16.mxu0 0
    %1840 = vmatpush1.bf16.msra.mxu0 %v1650
    %1841 = vmatprep.subr.bf16.mxu0 0
    %1842 = vmatpush1.bf16.msra.mxu0 %v1651
    %1843 = vmatprep.subr.bf16.mxu0 0
    %1844 = vmatpush1.bf16.msra.mxu0 %v1652
    %1845 = vmatprep.subr.bf16.mxu0 0
    %1846 = vmatpush1.bf16.msra.mxu0 %v1653
    %1847 = vmatprep.mubr.bf16.mxu0 %v1282
    %1848 = vmatmul.mubr.bf16.gmra.mrb[0].mxu0 %v1281
    %v1849 = vpop.f32.mrb[0].mxu0
    %v1850 = vadd.f32 %v1753, %v1849
    %v1851 = vpop.f32.mrb[0].mxu0
    %v1852 = vpop.f32.mrb[0].mxu0
    %v1853 = vadd.f32 %v1756, %v1852
    %v1854 = vpop.f32.mrb[0].mxu0
    %1855 = vmatprep.mubr.bf16.mxu0 %v1288
    %1856 = vmatmul.mubr.bf16.gmra.mrb[0].mxu0 %v1287
    %v1857 = vpop.f32.mrb[0].mxu0
    %v1858 = vadd.f32 %v1761, %v1857
    %v1859 = vpop.f32.mrb[0].mxu0
    %v1860 = vpop.f32.mrb[0].mxu0
    %v1861 = vadd.f32 %v1764, %v1860
    %v1862 = vpop.f32.mrb[0].mxu0
    %1863 = vmatprep.mubr.bf16.mxu0 %v1294
    %1864 = vmatmul.mubr.bf16.gmra.mrb[0].mxu0 %v1293
    %v1865 = vpop.f32.mrb[0].mxu0
    %v1866 = vadd.f32 %v1769, %v1865
    %v1867 = vpop.f32.mrb[0].mxu0
    %v1868 = vpop.f32.mrb[0].mxu0
    %v1869 = vadd.f32 %v1772, %v1868
    %v1870 = vpop.f32.mrb[0].mxu0
    %1871 = vmatprep.mubr.bf16.mxu0 %v1300
    %1872 = vmatmul.mubr.bf16.gmra.mrb[0].mxu0 %v1299
    %v1873 = vpop.f32.mrb[0].mxu0
    %v1874 = vadd.f32 %v1777, %v1873
    %v1875 = vpop.f32.mrb[0].mxu0
    %v1876 = vpop.f32.mrb[0].mxu0
    %v1877 = vadd.f32 %v1780, %v1876
    %v1878 = vpop.f32.mrb[0].mxu0
    %1879 = vmatprep.mubr.bf16.mxu0 %v1306
    %1880 = vmatmul.mubr.bf16.gmra.mrb[0].mxu0 %v1305
    %v1881 = vpop.f32.mrb[0].mxu0
    %v1882 = vadd.f32 %v1785, %v1881
    %v1883 = vpop.f32.mrb[0].mxu0
    %v1884 = vpop.f32.mrb[0].mxu0
    %v1885 = vadd.f32 %v1788, %v1884
    %v1886 = vpop.f32.mrb[0].mxu0
    %1887 = vmatprep.mubr.bf16.mxu0 %v1312
    %1888 = vmatmul.mubr.bf16.gmra.mrb[0].mxu0 %v1311
    %v1889 = vpop.f32.mrb[0].mxu0
    %v1890 = vadd.f32 %v1793, %v1889
    %v1891 = vpop.f32.mrb[0].mxu0
    %v1892 = vpop.f32.mrb[0].mxu0
    %v1893 = vadd.f32 %v1796, %v1892
    %v1894 = vpop.f32.mrb[0].mxu0
    %1895 = vmatprep.mubr.bf16.mxu0 %v1318
    %1896 = vmatmul.mubr.bf16.gmra.mrb[0].mxu0 %v1317
    %v1897 = vpop.f32.mrb[0].mxu0
    %v1898 = vadd.f32 %v1801, %v1897
    %v1899 = vpop.f32.mrb[0].mxu0
    %v1900 = vpop.f32.mrb[0].mxu0
    %v1901 = vadd.f32 %v1804, %v1900
    %v1902 = vpop.f32.mrb[0].mxu0
    %1903 = vmatprep.mubr.bf16.mxu0 %v1324
    %1904 = vmatmul.mubr.bf16.gmra.mrb[0].mxu0 %v1323
    %v1905 = vpop.f32.mrb[0].mxu0
    %v1906 = vadd.f32 %v1809, %v1905
    %v1907 = vpop.f32.mrb[0].mxu0
    %v1908 = vpop.f32.mrb[0].mxu0
    %v1909 = vadd.f32 %v1812, %v1908
    %v1910 = vpop.f32.mrb[0].mxu0
    %1911 = vdwg.mxu0
    %1912 = vmatprep.subr.bf16.mxu0 0
    %1913 = vmatpush1.bf16.msra.mxu0 %v1654
    %1914 = vmatprep.subr.bf16.mxu0 0
    %1915 = vmatpush1.bf16.msra.mxu0 %v1655
    %1916 = vmatprep.subr.bf16.mxu0 0
    %1917 = vmatpush1.bf16.msra.mxu0 %v1656
    %1918 = vmatprep.subr.bf16.mxu0 0
    %1919 = vmatpush1.bf16.msra.mxu0 %v1657
    %1920 = vmatprep.subr.bf16.mxu0 0
    %1921 = vmatpush1.bf16.msra.mxu0 %v1658
    %1922 = vmatprep.subr.bf16.mxu0 0
    %1923 = vmatpush1.bf16.msra.mxu0 %v1659
    %1924 = vmatprep.subr.bf16.mxu0 0
    %1925 = vmatpush1.bf16.msra.mxu0 %v1660
    %1926 = vmatprep.subr.bf16.mxu0 0
    %1927 = vmatpush1.bf16.msra.mxu0 %v1661
    %1928 = vmatprep.subr.bf16.mxu0 0
    %1929 = vmatpush1.bf16.msra.mxu0 %v1662
    %1930 = vmatprep.subr.bf16.mxu0 0
    %1931 = vmatpush1.bf16.msra.mxu0 %v1663
    %1932 = vmatprep.subr.bf16.mxu0 0
    %1933 = vmatpush1.bf16.msra.mxu0 %v1664
    %1934 = vmatprep.subr.bf16.mxu0 0
    %1935 = vmatpush1.bf16.msra.mxu0 %v1665
    %1936 = vmatprep.subr.bf16.mxu0 0
    %1937 = vmatpush1.bf16.msra.mxu0 %v1666
    %1938 = vmatprep.subr.bf16.mxu0 0
    %1939 = vmatpush1.bf16.msra.mxu0 %v1667
    %1940 = vmatprep.subr.bf16.mxu0 0
    %1941 = vmatpush1.bf16.msra.mxu0 %v1668
    %1942 = vmatprep.subr.bf16.mxu0 0
    %1943 = vmatpush1.bf16.msra.mxu0 %v1669
    %1944 = vmatprep.mubr.bf16.mxu0 %v1284
    %1945 = vmatmul.mubr.bf16.gmra.mrb[0].mxu0 %v1283
    %v1946 = vpop.f32.mrb[0].mxu0
    %v1947 = vadd.f32 %v1850, %v1946
    %v1948 = vpop.f32.mrb[0].mxu0
    %v1949 = vpop.f32.mrb[0].mxu0
    %v1950 = vadd.f32 %v1853, %v1949
    %v1951 = vpop.f32.mrb[0].mxu0
    %1952 = vmatprep.mubr.bf16.mxu0 %v1290
    %1953 = vmatmul.mubr.bf16.gmra.mrb[0].mxu0 %v1289
    %v1954 = vpop.f32.mrb[0].mxu0
    %v1955 = vadd.f32 %v1858, %v1954
    %v1956 = vpop.f32.mrb[0].mxu0
    %v1957 = vpop.f32.mrb[0].mxu0
    %v1958 = vadd.f32 %v1861, %v1957
    %v1959 = vpop.f32.mrb[0].mxu0
    %1960 = vmatprep.mubr.bf16.mxu0 %v1296
    %1961 = vmatmul.mubr.bf16.gmra.mrb[0].mxu0 %v1295
    %v1962 = vpop.f32.mrb[0].mxu0
    %v1963 = vadd.f32 %v1866, %v1962
    %v1964 = vpop.f32.mrb[0].mxu0
    %v1965 = vpop.f32.mrb[0].mxu0
    %v1966 = vadd.f32 %v1869, %v1965
    %v1967 = vpop.f32.mrb[0].mxu0
    %1968 = vmatprep.mubr.bf16.mxu0 %v1302
    %1969 = vmatmul.mubr.bf16.gmra.mrb[0].mxu0 %v1301
    %v1970 = vpop.f32.mrb[0].mxu0
    %v1971 = vadd.f32 %v1874, %v1970
    %v1972 = vpop.f32.mrb[0].mxu0
    %v1973 = vpop.f32.mrb[0].mxu0
    %v1974 = vadd.f32 %v1877, %v1973
    %v1975 = vpop.f32.mrb[0].mxu0
    %1976 = vmatprep.mubr.bf16.mxu0 %v1308
    %1977 = vmatmul.mubr.bf16.gmra.mrb[0].mxu0 %v1307
    %v1978 = vpop.f32.mrb[0].mxu0
    %v1979 = vadd.f32 %v1882, %v1978
    %v1980 = vpop.f32.mrb[0].mxu0
    %v1981 = vpop.f32.mrb[0].mxu0
    %v1982 = vadd.f32 %v1885, %v1981
    %v1983 = vpop.f32.mrb[0].mxu0
    %1984 = vmatprep.mubr.bf16.mxu0 %v1314
    %1985 = vmatmul.mubr.bf16.gmra.mrb[0].mxu0 %v1313
    %v1986 = vpop.f32.mrb[0].mxu0
    %v1987 = vadd.f32 %v1890, %v1986
    %v1988 = vpop.f32.mrb[0].mxu0
    %v1989 = vpop.f32.mrb[0].mxu0
    %v1990 = vadd.f32 %v1893, %v1989
    %v1991 = vpop.f32.mrb[0].mxu0
    %1992 = vmatprep.mubr.bf16.mxu0 %v1320
    %1993 = vmatmul.mubr.bf16.gmra.mrb[0].mxu0 %v1319
    %v1994 = vpop.f32.mrb[0].mxu0
    %v1995 = vadd.f32 %v1898, %v1994
    %v1996 = vpop.f32.mrb[0].mxu0
    %v1997 = vpop.f32.mrb[0].mxu0
    %v1998 = vadd.f32 %v1901, %v1997
    %v1999 = vpop.f32.mrb[0].mxu0
    %2000 = vmatprep.mubr.bf16.mxu0 %v1326
    %2001 = vmatmul.mubr.bf16.gmra.mrb[0].mxu0 %v1325
    %v2002 = vpop.f32.mrb[0].mxu0
    %v2003 = vadd.f32 %v1906, %v2002
    %v2004 = vpop.f32.mrb[0].mxu0
    %v2005 = vpop.f32.mrb[0].mxu0
    %v2006 = vadd.f32 %v1909, %v2005
    %v2007 = vpop.f32.mrb[0].mxu0
    %2008 = vdwg.mxu0
    %v2009 = vmax.f32 %v1947, 0.0
    %v2010 = vmax.f32 %v1950, 0.0
    %v2011 = vmax.f32 %v1955, 0.0
    %v2012 = vmax.f32 %v1958, 0.0
    %v2013 = vmax.f32 %v1963, 0.0
    %v2014 = vmax.f32 %v1966, 0.0
    %v2015 = vmax.f32 %v1971, 0.0
    %v2016 = vmax.f32 %v1974, 0.0
    %v2017 = vmax.f32 %v1979, 0.0
    %v2018 = vmax.f32 %v1982, 0.0
    %v2019 = vmax.f32 %v1987, 0.0
    %v2020 = vmax.f32 %v1990, 0.0
    %v2021 = vmax.f32 %v1995, 0.0
    %v2022 = vmax.f32 %v1998, 0.0
    %v2023 = vmax.f32 %v2003, 0.0
    %v2024 = vmax.f32 %v2006, 0.0
    %v2025 = vpack.c.bf16 %v2010, %v2009
    %v2026 = vpack.c.bf16 %v2012, %v2011
    %v2027 = vpack.c.bf16 %v2014, %v2013
    %v2028 = vpack.c.bf16 %v2016, %v2015
    %v2029 = vpack.c.bf16 %v2018, %v2017
    %v2030 = vpack.c.bf16 %v2020, %v2019
    %v2031 = vpack.c.bf16 %v2022, %v2021
    %v2032 = vpack.c.bf16 %v2024, %v2023
    %v2033 = vld [vmem:[#allocation7] sm:$0xf]
    %v2034 = vld [vmem:[#allocation7 + $0x4] sm:$0xf]
    %v2035 = vld [vmem:[#allocation7 + $0x8] sm:$0xf]
    %v2036 = vld [vmem:[#allocation7 + $0xc] sm:$0xf]
    %v2037 = vld [vmem:[#allocation7 + $0x10] sm:$0xf]
    %v2038 = vld [vmem:[#allocation7 + $0x14] sm:$0xf]
    %v2039 = vld [vmem:[#allocation7 + $0x18] sm:$0xf]
    %v2040 = vld [vmem:[#allocation7 + $0x1c] sm:$0xf]
    %v2041 = vld [vmem:[#allocation7 + $0x20] sm:$0xf]
    %v2042 = vld [vmem:[#allocation7 + $0x24] sm:$0xf]
    %v2043 = vld [vmem:[#allocation7 + $0x28] sm:$0xf]
    %v2044 = vld [vmem:[#allocation7 + $0x2c] sm:$0xf]
    %v2045 = vld [vmem:[#allocation7 + $0x30] sm:$0xf]
    %v2046 = vld [vmem:[#allocation7 + $0x34] sm:$0xf]
    %v2047 = vld [vmem:[#allocation7 + $0x38] sm:$0xf]
    %v2048 = vld [vmem:[#allocation7 + $0x3c] sm:$0xf]
    %v2049 = vld [vmem:[%s4] sm:$0x1]
    %v2051 = vlaneseq
    %v2052 = vshrl.u32 %v2051, 7
    %v2053 = vsub.s32 0, %v2052
    %v2054 = vrot.slane %v2049, %v2053
    %v2072 = vunpack.c.l.b16 %v2033
    %v2073 = vunpack.c.l.b16 %v2034
    %v2074 = vunpack.c.l.b16 %v2035
    %v2075 = vunpack.c.l.b16 %v2036
    %v2076 = vunpack.c.l.b16 %v2037
    %v2077 = vunpack.c.l.b16 %v2038
    %v2078 = vunpack.c.l.b16 %v2039
    %v2079 = vunpack.c.l.b16 %v2040
    %v2080 = vunpack.c.l.b16 %v2041
    %v2081 = vunpack.c.l.b16 %v2042
    %v2082 = vunpack.c.l.b16 %v2043
    %v2083 = vunpack.c.l.b16 %v2044
    %v2084 = vunpack.c.l.b16 %v2045
    %v2085 = vunpack.c.l.b16 %v2046
    %v2086 = vunpack.c.l.b16 %v2047
    %v2087 = vunpack.c.l.b16 %v2048
    %v2088 = vpack.c.b16 %v2073, %v2072
    %v2089 = vpack.c.b16 %v2075, %v2074
    %v2090 = vpack.c.b16 %v2077, %v2076
    %v2091 = vpack.c.b16 %v2079, %v2078
    %v2092 = vpack.c.b16 %v2081, %v2080
    %v2093 = vpack.c.b16 %v2083, %v2082
    %v2094 = vpack.c.b16 %v2085, %v2084
    %v2095 = vpack.c.b16 %v2087, %v2086
    %2104 = vmatprep.subr.bf16.mxu0 0
    %2105 = vmatpush1.bf16.msra.mxu0 %v2088
    %2106 = vmatprep.subr.bf16.mxu0 0
    %2107 = vmatpush1.bf16.msra.mxu0 %v2089
    %2108 = vmatprep.subr.bf16.mxu0 0
    %2109 = vmatpush1.bf16.msra.mxu0 %v2090
    %2110 = vmatprep.subr.bf16.mxu0 0
    %2111 = vmatpush1.bf16.msra.mxu0 %v2091
    %2112 = vmatprep.subr.bf16.mxu0 0
    %2113 = vmatpush1.bf16.msra.mxu0 %v2092
    %2114 = vmatprep.subr.bf16.mxu0 0
    %2115 = vmatpush1.bf16.msra.mxu0 %v2093
    %2116 = vmatprep.subr.bf16.mxu0 0
    %2117 = vmatpush1.bf16.msra.mxu0 %v2094
    %2118 = vmatprep.subr.bf16.mxu0 0
    %2119 = vmatpush1.bf16.msra.mxu0 %v2095
    %2120 = vmatprep.subr.bf16.mxu0 0
    %2121 = vmatpush1.bf16.msra.mxu0 0
    %2122 = vmatprep.subr.bf16.mxu0 0
    %2123 = vmatpush1.bf16.msra.mxu0 0
    %2124 = vmatprep.subr.bf16.mxu0 0
    %2125 = vmatpush1.bf16.msra.mxu0 0
    %2126 = vmatprep.subr.bf16.mxu0 0
    %2127 = vmatpush1.bf16.msra.mxu0 0
    %2128 = vmatprep.subr.bf16.mxu0 0
    %2129 = vmatpush1.bf16.msra.mxu0 0
    %2130 = vmatprep.subr.bf16.mxu0 0
    %2131 = vmatpush1.bf16.msra.mxu0 0
    %2132 = vmatprep.subr.bf16.mxu0 0
    %2133 = vmatpush1.bf16.msra.mxu0 0
    %2134 = vmatprep.subr.bf16.mxu0 0
    %2135 = vmatpush1.bf16.msra.mxu0 0
    %2136 = vmatprep.mubr.bf16.mxu0 0
    %2137 = vmatmul.mubr.bf16.gmra.mrb[0].mxu0 %v2025
    %v2138 = vpop.f32.mrb[0].mxu0
    %v2139 = vadd.f32 %v2054, %v2138
    %v2140 = vpop.f32.mrb[0].mxu0
    %v2141 = vpop.f32.mrb[0].mxu0
    %v2142 = vadd.f32 %v2054, %v2141
    %v2143 = vpop.f32.mrb[0].mxu0
    %2144 = vmatprep.mubr.bf16.mxu0 0
    %2145 = vmatmul.mubr.bf16.gmra.mrb[0].mxu0 %v2026
    %v2146 = vpop.f32.mrb[0].mxu0
    %v2147 = vadd.f32 %v2054, %v2146
    %v2148 = vpop.f32.mrb[0].mxu0
    %v2149 = vpop.f32.mrb[0].mxu0
    %v2150 = vadd.f32 %v2054, %v2149
    %v2151 = vpop.f32.mrb[0].mxu0
    %2152 = vmatprep.mubr.bf16.mxu0 0
    %2153 = vmatmul.mubr.bf16.gmra.mrb[0].mxu0 %v2027
    %v2154 = vpop.f32.mrb[0].mxu0
    %v2155 = vadd.f32 %v2054, %v2154
    %v2156 = vpop.f32.mrb[0].mxu0
    %v2157 = vpop.f32.mrb[0].mxu0
    %v2158 = vadd.f32 %v2054, %v2157
    %v2159 = vpop.f32.mrb[0].mxu0
    %2160 = vmatprep.mubr.bf16.mxu0 0
    %2161 = vmatmul.mubr.bf16.gmra.mrb[0].mxu0 %v2028
    %v2162 = vpop.f32.mrb[0].mxu0
    %v2163 = vadd.f32 %v2054, %v2162
    %v2164 = vpop.f32.mrb[0].mxu0
    %v2165 = vpop.f32.mrb[0].mxu0
    %v2166 = vadd.f32 %v2054, %v2165
    %v2167 = vpop.f32.mrb[0].mxu0
    %2168 = vmatprep.mubr.bf16.mxu0 0
    %2169 = vmatmul.mubr.bf16.gmra.mrb[0].mxu0 %v2029
    %v2170 = vpop.f32.mrb[0].mxu0
    %v2171 = vadd.f32 %v2054, %v2170
    %v2172 = vpop.f32.mrb[0].mxu0
    %v2173 = vpop.f32.mrb[0].mxu0
    %v2174 = vadd.f32 %v2054, %v2173
    %v2175 = vpop.f32.mrb[0].mxu0
    %2176 = vmatprep.mubr.bf16.mxu0 0
    %2177 = vmatmul.mubr.bf16.gmra.mrb[0].mxu0 %v2030
    %v2178 = vpop.f32.mrb[0].mxu0
    %v2179 = vadd.f32 %v2054, %v2178
    %v2180 = vpop.f32.mrb[0].mxu0
    %v2181 = vpop.f32.mrb[0].mxu0
    %v2182 = vadd.f32 %v2054, %v2181
    %v2183 = vpop.f32.mrb[0].mxu0
    %2184 = vmatprep.mubr.bf16.mxu0 0
    %2185 = vmatmul.mubr.bf16.gmra.mrb[0].mxu0 %v2031
    %v2186 = vpop.f32.mrb[0].mxu0
    %v2187 = vadd.f32 %v2054, %v2186
    %v2188 = vpop.f32.mrb[0].mxu0
    %v2189 = vpop.f32.mrb[0].mxu0
    %v2190 = vadd.f32 %v2054, %v2189
    %v2191 = vpop.f32.mrb[0].mxu0
    %2192 = vmatprep.mubr.bf16.mxu0 0
    %2193 = vmatmul.mubr.bf16.gmra.mrb[0].mxu0 %v2032
    %v2194 = vpop.f32.mrb[0].mxu0
    %v2195 = vadd.f32 %v2054, %v2194
    %v2196 = vpop.f32.mrb[0].mxu0
    %v2197 = vpop.f32.mrb[0].mxu0
    %v2198 = vadd.f32 %v2054, %v2197
    %v2199 = vpop.f32.mrb[0].mxu0
    %2200 = vdwg.mxu0
    %2201 = vst [vmem:[#allocation8] sm:$0xff] %v2139
    %2202 = vst [vmem:[#allocation8 + $0x8] sm:$0xff] %v2142
    %2203 = vst [vmem:[#allocation8 + $0x10] sm:$0xff] %v2147
    %2204 = vst [vmem:[#allocation8 + $0x18] sm:$0xff] %v2150
    %2205 = vst [vmem:[#allocation8 + $0x20] sm:$0xff] %v2155
    %2206 = vst [vmem:[#allocation8 + $0x28] sm:$0xff] %v2158
    %2207 = vst [vmem:[#allocation8 + $0x30] sm:$0xff] %v2163
    %2208 = vst [vmem:[#allocation8 + $0x38] sm:$0xff] %v2166
    %2209 = vst [vmem:[#allocation8 + $0x40] sm:$0xff] %v2171
    %2210 = vst [vmem:[#allocation8 + $0x48] sm:$0xff] %v2174
    %2211 = vst [vmem:[#allocation8 + $0x50] sm:$0xff] %v2179
    %2212 = vst [vmem:[#allocation8 + $0x58] sm:$0xff] %v2182
    %2213 = vst [vmem:[#allocation8 + $0x60] sm:$0xff] %v2187
    %2214 = vst [vmem:[#allocation8 + $0x68] sm:$0xff] %v2190
    %2215 = vst [vmem:[#allocation8 + $0x70] sm:$0xff] %v2195
    %2216 = vst [vmem:[#allocation8 + $0x78] sm:$0xff] %v2198
    // Predicated region
    $region34: #{tpu_custom_call.1} parent=1 // pred_check
      _
    $region35: #{tpu_custom_call.1} parent=1 // pred_check_branch
      %2218 = sbr.rel (0) target = $region37
    $region36: #{tpu_custom_call.1} parent=1 // pred_region
      %s2220 = ssub.s32 2048, 32
      %2221 = vsyncadd [#allocation4], %s2220
      %s2222 = sshll.u32 [#allocation8], 4
      %s2223 = int_to_ptr.vmem [resolvable:$true] %s2222
      %2228 = dma.vmem_to_hbm [thread:$0]  %s2223, 32, %s5, [#allocation4], 32, 32, 2
    $region37: #{tpu_custom_call.1} parent=1 // pred_fallthru
      _
    // Predicated region
    $region38: #{tpu_custom_call.1} parent=1 // pred_check
      _
    $region39: #{tpu_custom_call.1} parent=1 // pred_check_branch
      %2230 = sbr.rel (0) target = $region41
    $region40: #{tpu_custom_call.1} parent=1 // pred_region
      %2231 = dma.done [#allocation4], 2048
    $region41: #{tpu_custom_call.1} parent=1 // pred_fallthru
      _
    %2232 = vsyncpa [#allocation3], 1
    %2233 = vsyncpa [#allocation6], 1
    %2234 = vsyncpa [#allocation4], 1

</llo_original>
